<compile_context>
chip_gen: v5e
topology: v5e:2x2
jax: 0.10.0
libtpu: 0.0.40
codegen_flags: <defaults>
</compile_context>

<pallas_src>
import functools

import jax
import jax.numpy as jnp
from jax.experimental import pallas as pl
from jax.experimental.pallas import tpu as pltpu

_LANE = 128                      # lane width: keep output channels lane-dense
_VMEM_LIMIT = 32 * 1024 * 1024   # safe on v5e/v6e/v7x; raise per-chip for big tiles


def _round_up(x, m):
    return (x + m - 1) // m * m


# --------------------------- fused conv (stride == 1) -------------------------
def _fused_conv_kernel(x_ref, w_ref, b_ref, o_ref, *, k, tr, wo, cin):
    """One batch element, one tile of `tr` output rows.

    x_ref: (1, Hp, Wp, Cin)     bf16 (full padded image, resident across row tiles)
    w_ref: (k*k, Cin, Cout_p)   bf16
    b_ref: (1, Cout_p)          f32
    o_ref: (1, tr, Wo, Cout_p)  f32
    """
    r = pl.program_id(1)
    row0 = pl.multiple_of(r * tr, tr)            # first input row of this tile
    cout_p = o_ref.shape[-1]
    acc = jnp.zeros((tr * wo, cout_p), jnp.float32)
    for kh in range(k):                          # static: unrolled at trace time
        for kw in range(k):
            xs = x_ref[0, pl.ds(row0 + kh, tr), pl.ds(kw, wo), :]   # (tr, wo, cin)
            acc = acc + jnp.dot(xs.reshape(tr * wo, cin),
                                w_ref[kh * k + kw],
                                preferred_element_type=jnp.float32)
    o_ref[...] = (acc + b_ref[...]).reshape(1, tr, wo, cout_p)


def _pick_row_tile(ho, wo, cout_p, acc_budget_bytes=1 << 20):
    """Largest divisor of Ho whose f32 accumulator fits the budget (cap 8 rows)."""
    max_rows = max(1, min(ho, acc_budget_bytes // (wo * cout_p * 4), 8))
    tr = 1
    for cand in range(1, max_rows + 1):
        if ho % cand == 0:
            tr = cand
    return tr


def _fused_conv(x_pad, w_packed, bias_p, k):
    n, hp, wp, cin = x_pad.shape
    cout_p = w_packed.shape[-1]
    ho, wo = hp - k + 1, wp - k + 1
    tr = _pick_row_tile(ho, wo, cout_p)
    kernel = functools.partial(_fused_conv_kernel, k=k, tr=tr, wo=wo, cin=cin)
    flops = 2 * n * ho * wo * cin * k * k * cout_p
    bytes_accessed = int(x_pad.size) * 2 + int(w_packed.size) * 2 \
        + int(bias_p.size) * 4 + n * ho * wo * cout_p * 4
    # NOTE: the padded image is held in VMEM per batch element; for very large
    # images switch to overlapping row-slab DMAs (manual make_async_copy).
    return pl.pallas_call(
        kernel,
        out_shape=jax.ShapeDtypeStruct((n, ho, wo, cout_p), jnp.float32),
        grid_spec=pltpu.PrefetchScalarGridSpec(
            num_scalar_prefetch=0,
            grid=(n, ho // tr),
            in_specs=[
                pl.BlockSpec((1, hp, wp, cin), lambda b, r: (b, 0, 0, 0)),
                pl.BlockSpec((k * k, cin, cout_p), lambda b, r: (0, 0, 0)),
                pl.BlockSpec((1, cout_p), lambda b, r: (0, 0)),
            ],
            out_specs=pl.BlockSpec((1, tr, wo, cout_p), lambda b, r: (b, r, 0, 0)),
        ),
        compiler_params=pltpu.CompilerParams(
            dimension_semantics=("parallel", "arbitrary"),
            vmem_limit_bytes=_VMEM_LIMIT),
        cost_estimate=pl.CostEstimate(flops=flops, transcendentals=0,
                                      bytes_accessed=bytes_accessed),
    )(x_pad, w_packed, bias_p)


# ----------------- tiled im2col matmul fallback (stride > 1) ------------------
def _matmul_bias_kernel(a_ref, b_ref, bias_ref, o_ref):
    # a: (tm, K) bf16   b: (K, Cout_p) bf16   bias: (1, Cout_p) f32   o: f32
    o_ref[...] = jnp.dot(a_ref[...], b_ref[...],
                         preferred_element_type=jnp.float32) + bias_ref[...]


def _im2col_conv(x_pad, w_packed, bias_p, k, stride):
    # TODO(synk): extend the fused stride-1 kernel to stride > 1 (strided pl.ds
    # loads); until then strided convs pay the k^2 im2col HBM inflation.
    n, hp, wp, cin = x_pad.shape
    cout_p = w_packed.shape[-1]
    ho = (hp - k) // stride + 1
    wo = (wp - k) // stride + 1
    cols = []
    for i in range(k):
        for j in range(k):
            cols.append(x_pad[:, i:i + stride * (ho - 1) + 1:stride,
                              j:j + stride * (wo - 1) + 1:stride, :])
    patches = jnp.stack(cols, axis=3).reshape(n * ho * wo, k * k * cin)  # bf16
    kdim = k * k * cin
    m = n * ho * wo
    tm = min(512, _round_up(m, 8))
    m_pad = _round_up(m, tm)
    if m_pad != m:
        patches = jnp.pad(patches, ((0, m_pad - m), (0, 0)))
    w2d = w_packed.reshape(kdim, cout_p)
    y = pl.pallas_call(
        _matmul_bias_kernel,
        out_shape=jax.ShapeDtypeStruct((m_pad, cout_p), jnp.float32),
        grid_spec=pltpu.PrefetchScalarGridSpec(
            num_scalar_prefetch=0,
            grid=(m_pad // tm,),
            in_specs=[
                pl.BlockSpec((tm, kdim), lambda i: (i, 0)),
                pl.BlockSpec((kdim, cout_p), lambda i: (0, 0)),
                pl.BlockSpec((1, cout_p), lambda i: (0, 0)),
            ],
            out_specs=pl.BlockSpec((tm, cout_p), lambda i: (i, 0)),
        ),
        compiler_params=pltpu.CompilerParams(
            dimension_semantics=("parallel",),
            vmem_limit_bytes=_VMEM_LIMIT),
        cost_estimate=pl.CostEstimate(
            flops=2 * m_pad * kdim * cout_p, transcendentals=0,
            bytes_accessed=m_pad * kdim * 2 + kdim * cout_p * 2
            + cout_p * 4 + m_pad * cout_p * 4),
    )(patches, w2d, bias_p)
    return y[:m].reshape(n, ho, wo, cout_p)


# ------------------------------ module wrapper ---------------------------------
def prepare_conv_params(weight, bias):
    """Pack Conv2d parameters once per layer (hoisted out of the forward path).

    weight: (Cout, Cin, k, k) f32 -> (k*k, Cin, Cout_p) bf16 (Cout_p lane-dense).
    bias:   (Cout,)           f32 -> (1, Cout_p) f32.
    """
    cout, cin, k, _ = weight.shape
    cout_p = _round_up(cout, _LANE)
    w = jnp.transpose(weight, (2, 3, 1, 0)).reshape(k * k, cin, cout)
    w = jnp.pad(w, ((0, 0), (0, 0), (0, cout_p - cout))).astype(jnp.bfloat16)
    b = jnp.pad(bias.astype(jnp.float32), (0, cout_p - cout)).reshape(1, cout_p)
    return w, b


@functools.partial(jax.jit,
                   static_argnames=("kernel_size", "stride", "out_channels"))
def conv_layer_apply(x, w_packed, bias_p, *, kernel_size, stride, out_channels):
    """ConvLayer.forward: ReflectionPad2d(k//2) then Conv2d(k, stride).

    x: (N, Cin, H, W) f32 NCHW (PyTorch convention); returns NCHW f32.
    """
    k = kernel_size
    pad = k // 2                                  # int(np.floor(kernel_size / 2))
    # NCHW -> NHWC once at the module boundary (a full model should stay NHWC).
    x = jnp.transpose(x, (0, 2, 3, 1))
    x = jnp.pad(x, ((0, 0), (pad, pad), (pad, pad), (0, 0)), mode="reflect")
    x = x.astype(jnp.bfloat16)                    # bf16 operands, f32 accumulate
    if stride == 1:
        y = _fused_conv(x, w_packed, bias_p, k)
    else:
        y = _im2col_conv(x, w_packed, bias_p, k, stride)
    y = y[..., :out_channels]                     # drop lane padding
    return jnp.transpose(y, (0, 3, 1, 2))         # NHWC -> NCHW


def conv_layer_forward(x, weight, bias, kernel_size, stride):
    """One-shot convenience API matching the original wrapper signature."""
    w_packed, bias_p = prepare_conv_params(weight, bias)
    return conv_layer_apply(x, w_packed, bias_p, kernel_size=kernel_size,
                            stride=stride, out_channels=weight.shape[0])


# ----------------------------------- driver ------------------------------------
if __name__ == "__main__":
    key = jax.random.PRNGKey(0)
    kx, kw_, kb = jax.random.split(key, 3)

    N, Cin, H, W = 2, 4, 16, 16
    Cout, ksize = 8, 3

    x = jax.random.normal(kx, (N, Cin, H, W), dtype=jnp.float32)
    fan_in = Cin * ksize * ksize
    bound = 1.0 / fan_in ** 0.5
    weight = jax.random.uniform(kw_, (Cout, Cin, ksize, ksize),
                                minval=-bound, maxval=bound, dtype=jnp.float32)
    bias = jax.random.uniform(kb, (Cout,), minval=-bound, maxval=bound,
                              dtype=jnp.float32)

    # Reference uses the same bf16-rounded operands the kernel sees (the bf16
    # cast is an intentional perf choice; accumulation stays f32 in both).
    x_r = x.astype(jnp.bfloat16).astype(jnp.float32)
    w_r = weight.astype(jnp.bfloat16).astype(jnp.float32)

    def reference(stride):
        pad = ksize // 2
        xp = jnp.pad(x_r, ((0, 0), (0, 0), (pad, pad), (pad, pad)), mode="reflect")
        y = jax.lax.conv_general_dilated(
            xp, w_r, window_strides=(stride, stride), padding="VALID",
            dimension_numbers=("NCHW", "OIHW", "NCHW"),
            precision=jax.lax.Precision.HIGHEST)
        return y + bias.reshape(1, Cout, 1, 1)

    w_packed, bias_p = prepare_conv_params(weight, bias)   # hoisted, once per layer

    # stride=1 -> fused conv kernel (no im2col); stride=2 -> tiled matmul path.
    for stride in (1, 2):
        out = conv_layer_apply(x, w_packed, bias_p, kernel_size=ksize,
                               stride=stride, out_channels=Cout)
        out = jax.block_until_ready(out)
        ref = jax.block_until_ready(reference(stride))
        assert out.shape == ref.shape, (stride, out.shape, ref.shape)
        if stride == 1:
            assert out.shape == (N, Cout, H, W), out.shape
        err = float(jnp.max(jnp.abs(out - ref)))
        assert jnp.allclose(out, ref, atol=5e-3, rtol=5e-3), (stride, err)

    print("KERNEL_OK")
</pallas_src>

<mosaic_0001>
module attributes {stable_mosaic.version = 11 : i64} {
  func.func @_fused_conv_kernel(%arg0: i32, %arg1: i32, %arg2: memref<1x18x18x4xbf16, #tpu.memory_space<vmem>>, %arg3: memref<9x4x128xbf16, #tpu.memory_space<vmem>>, %arg4: memref<1x128xf32, #tpu.memory_space<vmem>>, %arg5: memref<1x8x16x128xf32, #tpu.memory_space<vmem>>) attributes {dimension_semantics = [#tpu.dimension_semantics<parallel>, #tpu.dimension_semantics<arbitrary>], iteration_bounds = array<i64: 2, 2>, scalar_prefetch = 0 : i64, scratch_operands = 0 : i64, tpu.core_type = #tpu.core_type<tc>, window_params = [{transform_indices = @transform_0, window_bounds = array<i64: 1, 18, 18, 4>}, {pipeline_mode = #tpu.pipeline_mode<synchronous>, transform_indices = @transform_1, window_bounds = array<i64: 9, 4, 128>}, {pipeline_mode = #tpu.pipeline_mode<synchronous>, transform_indices = @transform_2, window_bounds = array<i64: 1, 128>}, {transform_indices = @transform_3, window_bounds = array<i64: 1, 8, 16, 128>}]} {
    %c8_i32 = arith.constant 8 : i32
    %0 = arith.muli %arg1, %c8_i32 : i32
    %1 = tpu.assume_multiple %0, 8 : i32
    %cst = arith.constant 0.000000e+00 : f32
    %2 = vector.broadcast %cst : f32 to vector<128x128xf32>
    %c0_i32 = arith.constant 0 : i32
    %3 = arith.addi %1, %c0_i32 : i32
    %c0 = arith.constant 0 : index
    %4 = arith.index_cast %3 : i32 to index
    %c0_0 = arith.constant 0 : index
    %c0_1 = arith.constant 0 : index
    %5 = vector.load %arg2[%c0, %4, %c0_0, %c0_1] : memref<1x18x18x4xbf16, #tpu.memory_space<vmem>>, vector<1x8x16x4xbf16>
    %6 = vector.shape_cast %5 : vector<1x8x16x4xbf16> to vector<8x16x4xbf16>
    %7 = vector.shape_cast %6 : vector<8x16x4xbf16> to vector<128x4xbf16>
    %c0_2 = arith.constant 0 : index
    %c0_3 = arith.constant 0 : index
    %c0_4 = arith.constant 0 : index
    %8 = vector.load %arg3[%c0_2, %c0_3, %c0_4] : memref<9x4x128xbf16, #tpu.memory_space<vmem>>, vector<1x4x128xbf16>
    %9 = vector.shape_cast %8 : vector<1x4x128xbf16> to vector<4x128xbf16>
    %cst_5 = arith.constant dense<0.000000e+00> : vector<128x128xf32>
    %10 = tpu.matmul %7, %9, %cst_5 {dimension_numbers = #tpu.dot_dimension_numbers<[1], [0], [0], [1], [0, 0, 1, 1], [], []>} : vector<128x4xbf16>, vector<4x128xbf16>, vector<128x128xf32> -> vector<128x128xf32>
    %11 = arith.addf %2, %10 : vector<128x128xf32>
    %c0_i32_6 = arith.constant 0 : i32
    %12 = arith.addi %1, %c0_i32_6 : i32
    %c0_7 = arith.constant 0 : index
    %13 = arith.index_cast %12 : i32 to index
    %c1 = arith.constant 1 : index
    %c0_8 = arith.constant 0 : index
    %14 = vector.load %arg2[%c0_7, %13, %c1, %c0_8] : memref<1x18x18x4xbf16, #tpu.memory_space<vmem>>, vector<1x8x16x4xbf16>
    %15 = vector.shape_cast %14 : vector<1x8x16x4xbf16> to vector<8x16x4xbf16>
    %16 = vector.shape_cast %15 : vector<8x16x4xbf16> to vector<128x4xbf16>
    %c1_9 = arith.constant 1 : index
    %c0_10 = arith.constant 0 : index
    %c0_11 = arith.constant 0 : index
    %17 = vector.load %arg3[%c1_9, %c0_10, %c0_11] : memref<9x4x128xbf16, #tpu.memory_space<vmem>>, vector<1x4x128xbf16>
    %18 = vector.shape_cast %17 : vector<1x4x128xbf16> to vector<4x128xbf16>
    %cst_12 = arith.constant dense<0.000000e+00> : vector<128x128xf32>
    %19 = tpu.matmul %16, %18, %cst_12 {dimension_numbers = #tpu.dot_dimension_numbers<[1], [0], [0], [1], [0, 0, 1, 1], [], []>} : vector<128x4xbf16>, vector<4x128xbf16>, vector<128x128xf32> -> vector<128x128xf32>
    %20 = arith.addf %11, %19 : vector<128x128xf32>
    %c0_i32_13 = arith.constant 0 : i32
    %21 = arith.addi %1, %c0_i32_13 : i32
    %c0_14 = arith.constant 0 : index
    %22 = arith.index_cast %21 : i32 to index
    %c2 = arith.constant 2 : index
    %c0_15 = arith.constant 0 : index
    %23 = vector.load %arg2[%c0_14, %22, %c2, %c0_15] : memref<1x18x18x4xbf16, #tpu.memory_space<vmem>>, vector<1x8x16x4xbf16>
    %24 = vector.shape_cast %23 : vector<1x8x16x4xbf16> to vector<8x16x4xbf16>
    %25 = vector.shape_cast %24 : vector<8x16x4xbf16> to vector<128x4xbf16>
    %c2_16 = arith.constant 2 : index
    %c0_17 = arith.constant 0 : index
    %c0_18 = arith.constant 0 : index
    %26 = vector.load %arg3[%c2_16, %c0_17, %c0_18] : memref<9x4x128xbf16, #tpu.memory_space<vmem>>, vector<1x4x128xbf16>
    %27 = vector.shape_cast %26 : vector<1x4x128xbf16> to vector<4x128xbf16>
    %cst_19 = arith.constant dense<0.000000e+00> : vector<128x128xf32>
    %28 = tpu.matmul %25, %27, %cst_19 {dimension_numbers = #tpu.dot_dimension_numbers<[1], [0], [0], [1], [0, 0, 1, 1], [], []>} : vector<128x4xbf16>, vector<4x128xbf16>, vector<128x128xf32> -> vector<128x128xf32>
    %29 = arith.addf %20, %28 : vector<128x128xf32>
    %c1_i32 = arith.constant 1 : i32
    %30 = arith.addi %1, %c1_i32 : i32
    %c0_20 = arith.constant 0 : index
    %31 = arith.index_cast %30 : i32 to index
    %c0_21 = arith.constant 0 : index
    %c0_22 = arith.constant 0 : index
    %32 = vector.load %arg2[%c0_20, %31, %c0_21, %c0_22] : memref<1x18x18x4xbf16, #tpu.memory_space<vmem>>, vector<1x8x16x4xbf16>
    %33 = vector.shape_cast %32 : vector<1x8x16x4xbf16> to vector<8x16x4xbf16>
    %34 = vector.shape_cast %33 : vector<8x16x4xbf16> to vector<128x4xbf16>
    %c3 = arith.constant 3 : index
    %c0_23 = arith.constant 0 : index
    %c0_24 = arith.constant 0 : index
    %35 = vector.load %arg3[%c3, %c0_23, %c0_24] : memref<9x4x128xbf16, #tpu.memory_space<vmem>>, vector<1x4x128xbf16>
    %36 = vector.shape_cast %35 : vector<1x4x128xbf16> to vector<4x128xbf16>
    %cst_25 = arith.constant dense<0.000000e+00> : vector<128x128xf32>
    %37 = tpu.matmul %34, %36, %cst_25 {dimension_numbers = #tpu.dot_dimension_numbers<[1], [0], [0], [1], [0, 0, 1, 1], [], []>} : vector<128x4xbf16>, vector<4x128xbf16>, vector<128x128xf32> -> vector<128x128xf32>
    %38 = arith.addf %29, %37 : vector<128x128xf32>
    %c1_i32_26 = arith.constant 1 : i32
    %39 = arith.addi %1, %c1_i32_26 : i32
    %c0_27 = arith.constant 0 : index
    %40 = arith.index_cast %39 : i32 to index
    %c1_28 = arith.constant 1 : index
    %c0_29 = arith.constant 0 : index
    %41 = vector.load %arg2[%c0_27, %40, %c1_28, %c0_29] : memref<1x18x18x4xbf16, #tpu.memory_space<vmem>>, vector<1x8x16x4xbf16>
    %42 = vector.shape_cast %41 : vector<1x8x16x4xbf16> to vector<8x16x4xbf16>
    %43 = vector.shape_cast %42 : vector<8x16x4xbf16> to vector<128x4xbf16>
    %c4 = arith.constant 4 : index
    %c0_30 = arith.constant 0 : index
    %c0_31 = arith.constant 0 : index
    %44 = vector.load %arg3[%c4, %c0_30, %c0_31] : memref<9x4x128xbf16, #tpu.memory_space<vmem>>, vector<1x4x128xbf16>
    %45 = vector.shape_cast %44 : vector<1x4x128xbf16> to vector<4x128xbf16>
    %cst_32 = arith.constant dense<0.000000e+00> : vector<128x128xf32>
    %46 = tpu.matmul %43, %45, %cst_32 {dimension_numbers = #tpu.dot_dimension_numbers<[1], [0], [0], [1], [0, 0, 1, 1], [], []>} : vector<128x4xbf16>, vector<4x128xbf16>, vector<128x128xf32> -> vector<128x128xf32>
    %47 = arith.addf %38, %46 : vector<128x128xf32>
    %c1_i32_33 = arith.constant 1 : i32
    %48 = arith.addi %1, %c1_i32_33 : i32
    %c0_34 = arith.constant 0 : index
    %49 = arith.index_cast %48 : i32 to index
    %c2_35 = arith.constant 2 : index
    %c0_36 = arith.constant 0 : index
    %50 = vector.load %arg2[%c0_34, %49, %c2_35, %c0_36] : memref<1x18x18x4xbf16, #tpu.memory_space<vmem>>, vector<1x8x16x4xbf16>
    %51 = vector.shape_cast %50 : vector<1x8x16x4xbf16> to vector<8x16x4xbf16>
    %52 = vector.shape_cast %51 : vector<8x16x4xbf16> to vector<128x4xbf16>
    %c5 = arith.constant 5 : index
    %c0_37 = arith.constant 0 : index
    %c0_38 = arith.constant 0 : index
    %53 = vector.load %arg3[%c5, %c0_37, %c0_38] : memref<9x4x128xbf16, #tpu.memory_space<vmem>>, vector<1x4x128xbf16>
    %54 = vector.shape_cast %53 : vector<1x4x128xbf16> to vector<4x128xbf16>
    %cst_39 = arith.constant dense<0.000000e+00> : vector<128x128xf32>
    %55 = tpu.matmul %52, %54, %cst_39 {dimension_numbers = #tpu.dot_dimension_numbers<[1], [0], [0], [1], [0, 0, 1, 1], [], []>} : vector<128x4xbf16>, vector<4x128xbf16>, vector<128x128xf32> -> vector<128x128xf32>
    %56 = arith.addf %47, %55 : vector<128x128xf32>
    %c2_i32 = arith.constant 2 : i32
    %57 = arith.addi %1, %c2_i32 : i32
    %c0_40 = arith.constant 0 : index
    %58 = arith.index_cast %57 : i32 to index
    %c0_41 = arith.constant 0 : index
    %c0_42 = arith.constant 0 : index
    %59 = vector.load %arg2[%c0_40, %58, %c0_41, %c0_42] : memref<1x18x18x4xbf16, #tpu.memory_space<vmem>>, vector<1x8x16x4xbf16>
    %60 = vector.shape_cast %59 : vector<1x8x16x4xbf16> to vector<8x16x4xbf16>
    %61 = vector.shape_cast %60 : vector<8x16x4xbf16> to vector<128x4xbf16>
    %c6 = arith.constant 6 : index
    %c0_43 = arith.constant 0 : index
    %c0_44 = arith.constant 0 : index
    %62 = vector.load %arg3[%c6, %c0_43, %c0_44] : memref<9x4x128xbf16, #tpu.memory_space<vmem>>, vector<1x4x128xbf16>
    %63 = vector.shape_cast %62 : vector<1x4x128xbf16> to vector<4x128xbf16>
    %cst_45 = arith.constant dense<0.000000e+00> : vector<128x128xf32>
    %64 = tpu.matmul %61, %63, %cst_45 {dimension_numbers = #tpu.dot_dimension_numbers<[1], [0], [0], [1], [0, 0, 1, 1], [], []>} : vector<128x4xbf16>, vector<4x128xbf16>, vector<128x128xf32> -> vector<128x128xf32>
    %65 = arith.addf %56, %64 : vector<128x128xf32>
    %c2_i32_46 = arith.constant 2 : i32
    %66 = arith.addi %1, %c2_i32_46 : i32
    %c0_47 = arith.constant 0 : index
    %67 = arith.index_cast %66 : i32 to index
    %c1_48 = arith.constant 1 : index
    %c0_49 = arith.constant 0 : index
    %68 = vector.load %arg2[%c0_47, %67, %c1_48, %c0_49] : memref<1x18x18x4xbf16, #tpu.memory_space<vmem>>, vector<1x8x16x4xbf16>
    %69 = vector.shape_cast %68 : vector<1x8x16x4xbf16> to vector<8x16x4xbf16>
    %70 = vector.shape_cast %69 : vector<8x16x4xbf16> to vector<128x4xbf16>
    %c7 = arith.constant 7 : index
    %c0_50 = arith.constant 0 : index
    %c0_51 = arith.constant 0 : index
    %71 = vector.load %arg3[%c7, %c0_50, %c0_51] : memref<9x4x128xbf16, #tpu.memory_space<vmem>>, vector<1x4x128xbf16>
    %72 = vector.shape_cast %71 : vector<1x4x128xbf16> to vector<4x128xbf16>
    %cst_52 = arith.constant dense<0.000000e+00> : vector<128x128xf32>
    %73 = tpu.matmul %70, %72, %cst_52 {dimension_numbers = #tpu.dot_dimension_numbers<[1], [0], [0], [1], [0, 0, 1, 1], [], []>} : vector<128x4xbf16>, vector<4x128xbf16>, vector<128x128xf32> -> vector<128x128xf32>
    %74 = arith.addf %65, %73 : vector<128x128xf32>
    %c2_i32_53 = arith.constant 2 : i32
    %75 = arith.addi %1, %c2_i32_53 : i32
    %c0_54 = arith.constant 0 : index
    %76 = arith.index_cast %75 : i32 to index
    %c2_55 = arith.constant 2 : index
    %c0_56 = arith.constant 0 : index
    %77 = vector.load %arg2[%c0_54, %76, %c2_55, %c0_56] : memref<1x18x18x4xbf16, #tpu.memory_space<vmem>>, vector<1x8x16x4xbf16>
    %78 = vector.shape_cast %77 : vector<1x8x16x4xbf16> to vector<8x16x4xbf16>
    %79 = vector.shape_cast %78 : vector<8x16x4xbf16> to vector<128x4xbf16>
    %c8 = arith.constant 8 : index
    %c0_57 = arith.constant 0 : index
    %c0_58 = arith.constant 0 : index
    %80 = vector.load %arg3[%c8, %c0_57, %c0_58] : memref<9x4x128xbf16, #tpu.memory_space<vmem>>, vector<1x4x128xbf16>
    %81 = vector.shape_cast %80 : vector<1x4x128xbf16> to vector<4x128xbf16>
    %cst_59 = arith.constant dense<0.000000e+00> : vector<128x128xf32>
    %82 = tpu.matmul %79, %81, %cst_59 {dimension_numbers = #tpu.dot_dimension_numbers<[1], [0], [0], [1], [0, 0, 1, 1], [], []>} : vector<128x4xbf16>, vector<4x128xbf16>, vector<128x128xf32> -> vector<128x128xf32>
    %83 = arith.addf %74, %82 : vector<128x128xf32>
    %c0_60 = arith.constant 0 : index
    %c0_61 = arith.constant 0 : index
    %84 = vector.load %arg4[%c0_60, %c0_61] : memref<1x128xf32, #tpu.memory_space<vmem>>, vector<1x128xf32>
    %85 = vector.broadcast %84 : vector<1x128xf32> to vector<128x128xf32>
    %86 = arith.addf %83, %85 : vector<128x128xf32>
    %87 = vector.shape_cast %86 : vector<128x128xf32> to vector<1x8x16x128xf32>
    %c0_62 = arith.constant 0 : index
    %c0_63 = arith.constant 0 : index
    %c0_64 = arith.constant 0 : index
    %c0_65 = arith.constant 0 : index
    %88 = vector.load %arg5[%c0_62, %c0_63, %c0_64, %c0_65] : memref<1x8x16x128xf32, #tpu.memory_space<vmem>>, vector<1x8x16x128xf32>
    tpu.vector_store %arg5[%c0_62, %c0_63, %c0_64, %c0_65], %87 {strides = array<i32>} : memref<1x8x16x128xf32, #tpu.memory_space<vmem>>, vector<1x8x16x128xf32>,
    return
  }
  func.func @transform_0(%arg0: i32, %arg1: i32) -> (i32, i32, i32, i32) {
    %c0_i32 = arith.constant 0 : i32
    %c0_i32_0 = arith.constant 0 : i32
    %c0_i32_1 = arith.constant 0 : i32
    %c0_i32_2 = arith.constant 0 : i32
    return %arg0, %c0_i32, %c0_i32_0, %c0_i32_1 : i32, i32, i32, i32
  }
  func.func @transform_1(%arg0: i32, %arg1: i32) -> (i32, i32, i32) {
    %c0_i32 = arith.constant 0 : i32
    %c0_i32_0 = arith.constant 0 : i32
    %c0_i32_1 = arith.constant 0 : i32
    %c0_i32_2 = arith.constant 0 : i32
    return %c0_i32, %c0_i32_0, %c0_i32_1 : i32, i32, i32
  }
  func.func @transform_2(%arg0: i32, %arg1: i32) -> (i32, i32) {
    %c0_i32 = arith.constant 0 : i32
    %c0_i32_0 = arith.constant 0 : i32
    %c0_i32_1 = arith.constant 0 : i32
    return %c0_i32, %c0_i32_0 : i32, i32
  }
  func.func @transform_3(%arg0: i32, %arg1: i32) -> (i32, i32, i32, i32) {
    %c0_i32 = arith.constant 0 : i32
    %c0_i32_0 = arith.constant 0 : i32
    %c0_i32_1 = arith.constant 0 : i32
    return %arg0, %arg1, %c0_i32, %c0_i32_0 : i32, i32, i32, i32
  }
}

</mosaic_0001>

<llo_original>
// kernel: conv_layer_apply.1
$region0: #{conv_layer_apply.1}
  #allocation0 [shape = 'u32[]', space=smem, size = 0x4, offset = 0x4, fixed_abs, tag = 'smem constant byte address 0x4 - core index']
  #allocation1 [shape = 'u32[72,128]{1,0:T(1,128)}', space=vmem, size = 0x9000, scoped, tag = 'internal scratch']
  %s0 = inlined_call_operand.vmem [shape: bf16[2,18,18,4], index: 0, kind: input, shape index: {}]
  %s1 = inlined_call_operand.vmem [shape: bf16[9,4,128], index: 1, kind: input, shape index: {}]
  %s2 = inlined_call_operand.vmem [shape: f32[1,128], index: 2, kind: input, shape index: {}]
  %s3 = inlined_call_operand.vmem [shape: f32[2,16,16,128], index: 3, kind: output, shape index: {}]
  %s4 = sld [smem:[#allocation0]]
  $region45: #{conv_layer_apply.1} parent=0
    _
  %s6 = ssub.s32 1, %s4
  %s7 = scalar_select 0, %s6, %s4
  loop: start=0, step=1, limit=6
  $region2: #{conv_layer_apply.1} parent=0 // loop_pre_header
    _
  $region3: #{conv_layer_apply.1} parent=0 // loop_header
    %s9 = sphi 0, %s13
    %p10 = scmp.ge.s32.totalorder %s9, 6
    %s16 = sphi 0, %s28
    %s17 = sphi 0, %s24
    %s18 = sphi 0, %s16
    %s19 = sphi 0, %s17
    %s20 = sphi 0, %s18
    %s21 = sphi 0, %s19
    %s31 = sphi 0, %s33
    %s34 = sphi 0, %s31
    %s35 = sphi 0, %s34
    %s51 = sphi 0, %s35
    %s55 = sphi 0, %s55
    %s57 = sphi 0, %s55
    %s58 = sphi 0, %s57
    %s72 = sphi 0, %s58
    %s76 = sphi 0, %s76
    %s78 = sphi 0, %s76
    %s79 = sphi 0, %s78
    %s93 = sphi 0, %s79
    %s101 = sphi 0, %s103
    %s104 = sphi 0, %s101
    %s105 = sphi 0, %s104
    %s121 = sphi 0, %s105
  $region4: #{conv_layer_apply.1} parent=0 // loop_header_branch
    %12 = sbr.rel (%p10) target = $region8
  $region5: #{conv_layer_apply.1} parent=0 // loop_body
    %s14 = ssub.s32 %s9, 1
    %s15 = ssub.s32 %s9, 2
    %s22 = sadd.s32 1, %s17
    %p23 = scmp.ge.s32.totalorder %s22, 2
    %s24 = scalar_select %p23, 0, %s22
    %s25 = sadd.s32 1, %s16
    %s26 = scalar_select %p23, %s25, %s16
    %p27 = scmp.ge.s32.totalorder %s26, 2
    %s28 = scalar_select %p27, 0, %s26
    %s29 = ssub.s32 %s16, %s28
    %p30 = scmp.eq.s32.totalorder %s29, 0
    %s32 = sadd.s32 %s31, 1
    %s33 = scalar_select %p30, %s31, %s32
    %p36 = pneg %p30
    %p37 = scmp.eq.s32.totalorder %s9, 3
    %p38 = por %p36, %p37
    %p39 = scmp.ne.s32.totalorder %s31, %s34
    %p40 = scmp.eq.s32.totalorder %s9, 0
    %p41 = por %p39, %p40
    %p42 = scmp.ne.s32.totalorder %s31, %s34
    %p43 = scmp.eq.s32.totalorder %s14, 3
    %p44 = por %p42, %p43
    %p45 = scmp.ne.s32.totalorder %s34, %s35
    %p46 = scmp.eq.s32.totalorder %s14, 0
    %p47 = por %p45, %p46
    %p48 = scmp.ne.s32.totalorder %s34, %s35
    %p49 = scmp.eq.s32.totalorder %s15, 3
    %p50 = por %p48, %p49
    %p52 = scmp.ne.s32.totalorder %s35, %s51
    %p53 = scmp.eq.s32.totalorder %s15, 0
    %p54 = por %p52, %p53
    %s56 = sadd.s32 %s55, 1
    %p59 = scmp.eq.s32.totalorder %s9, 3
    %p60 = scmp.ne.s32.totalorder %s55, %s57
    %p61 = scmp.eq.s32.totalorder %s9, 0
    %p62 = por %p60, %p61
    %p63 = scmp.ne.s32.totalorder %s55, %s57
    %p64 = scmp.eq.s32.totalorder %s14, 3
    %p65 = por %p63, %p64
    %p66 = scmp.ne.s32.totalorder %s57, %s58
    %p67 = scmp.eq.s32.totalorder %s14, 0
    %p68 = por %p66, %p67
    %p69 = scmp.ne.s32.totalorder %s57, %s58
    %p70 = scmp.eq.s32.totalorder %s15, 3
    %p71 = por %p69, %p70
    %p73 = scmp.ne.s32.totalorder %s58, %s72
    %p74 = scmp.eq.s32.totalorder %s15, 0
    %p75 = por %p73, %p74
    %s77 = sadd.s32 %s76, 1
    %p80 = scmp.eq.s32.totalorder %s9, 3
    %p81 = scmp.ne.s32.totalorder %s76, %s78
    %p82 = scmp.eq.s32.totalorder %s9, 0
    %p83 = por %p81, %p82
    %p84 = scmp.ne.s32.totalorder %s76, %s78
    %p85 = scmp.eq.s32.totalorder %s14, 3
    %p86 = por %p84, %p85
    %p87 = scmp.ne.s32.totalorder %s78, %s79
    %p88 = scmp.eq.s32.totalorder %s14, 0
    %p89 = por %p87, %p88
    %p90 = scmp.ne.s32.totalorder %s78, %s79
    %p91 = scmp.eq.s32.totalorder %s15, 3
    %p92 = por %p90, %p91
    %p94 = scmp.ne.s32.totalorder %s79, %s93
    %p95 = scmp.eq.s32.totalorder %s15, 0
    %p96 = por %p94, %p95
    %s97 = ssub.s32 %s16, %s28
    %s98 = ssub.s32 %s17, %s24
    %s99 = sor.u32 %s97, %s98
    %p100 = scmp.eq.s32.totalorder %s99, 0
    %s102 = sadd.s32 %s101, 1
    %s103 = scalar_select %p100, %s101, %s102
    %p106 = pneg %p100
    %p107 = scmp.eq.s32.totalorder %s9, 3
    %p108 = por %p106, %p107
    %p109 = scmp.ne.s32.totalorder %s101, %s104
    %p110 = scmp.eq.s32.totalorder %s9, 0
    %p111 = por %p109, %p110
    %p112 = scmp.ne.s32.totalorder %s101, %s104
    %p113 = scmp.eq.s32.totalorder %s14, 3
    %p114 = por %p112, %p113
    %p115 = scmp.ne.s32.totalorder %s104, %s105
    %p116 = scmp.eq.s32.totalorder %s14, 0
    %p117 = por %p115, %p116
    %p118 = scmp.ne.s32.totalorder %s104, %s105
    %p119 = scmp.eq.s32.totalorder %s15, 3
    %p120 = por %p118, %p119
    %p122 = scmp.ne.s32.totalorder %s105, %s121
    %p123 = scmp.eq.s32.totalorder %s15, 0
    %p124 = por %p122, %p123
    %p125 = scmp.le.s32.totalorder 1, %s9
    %p126 = scmp.lt.s32.totalorder %s9, 5
    %p127 = pnand %p125, %p126
    %p128 = pneg %p127
    // Predicated region
    $region9: #{conv_layer_apply.1} parent=5 // pred_check
      _
    $region10: #{conv_layer_apply.1} parent=5 // pred_check_branch
      %130 = sbr.rel (%p127) target = $region12
    $region11: #{conv_layer_apply.1} parent=5 // pred_region
      %s131 = ssub.s32 %s9, 1
      // Predicated region
      $region13: #{conv_layer_apply.1} parent=11 // pred_check
        %p132 = pneg %p68
      $region14: #{conv_layer_apply.1} parent=11 // pred_check_branch
        %134 = sbr.rel (%p132) target = $region16
      $region15: #{conv_layer_apply.1} parent=11 // pred_region
        _
      $region16: #{conv_layer_apply.1} parent=11 // pred_fallthru
        _
      // Predicated region
      $region17: #{conv_layer_apply.1} parent=11 // pred_check
        %p135 = pneg %p89
      $region18: #{conv_layer_apply.1} parent=11 // pred_check_branch
        %137 = sbr.rel (%p135) target = $region20
      $region19: #{conv_layer_apply.1} parent=11 // pred_region
        _
      $region20: #{conv_layer_apply.1} parent=11 // pred_fallthru
        _
    $region12: #{conv_layer_apply.1} parent=5 // pred_fallthru
      _
    %p138 = scmp.lt.s32.totalorder %s9, 4
    // Predicated region
    $region21: #{conv_layer_apply.1} parent=5 // pred_check
      %p139 = pneg %p138
    $region22: #{conv_layer_apply.1} parent=5 // pred_check_branch
      %141 = sbr.rel (%p139) target = $region24
    $region23: #{conv_layer_apply.1} parent=5 // pred_region
      // Predicated region
      $region25: #{conv_layer_apply.1} parent=23 // pred_check
        %p142 = pneg %p41
      $region26: #{conv_layer_apply.1} parent=23 // pred_check_branch
        %144 = sbr.rel (%p142) target = $region28
      $region27: #{conv_layer_apply.1} parent=23 // pred_region
        %p145 = scmp.lt.s32.totalorder %s16, 1
        %s146 = scalar_select %p145, %s16, 1
        %s147 = smul.addr %s146, 54
        %s148 = smul.addr %s147, 4
        %s149 = scalar_lea.vmem %s0, %s148
      $region28: #{conv_layer_apply.1} parent=23 // pred_fallthru
        _
    $region24: #{conv_layer_apply.1} parent=5 // pred_fallthru
      _
    %p150 = scmp.le.s32.totalorder 1, %s9
    %p151 = scmp.lt.s32.totalorder %s9, 5
    %p152 = pnand %p150, %p151
    %p153 = pneg %p152
    // Predicated region
    $region29: #{conv_layer_apply.1} parent=5 // pred_check
      _
    $region30: #{conv_layer_apply.1} parent=5 // pred_check_branch
      %155 = sbr.rel (%p152) target = $region32
    $region31: #{conv_layer_apply.1} parent=5 // pred_region
      %s156 = ssub.s32 %s9, 1
      %p157 = scmp.lt.s32.totalorder %s18, 1
      %s158 = scalar_select %p157, %s18, 1
      %s159 = smul.addr %s158, 54
      %s160 = smul.addr %s159, 4
      %s161 = scalar_lea.vmem %s0, %s160
      %p162 = pneg %p47
      %p163 = pneg %p44
      %p164 = pneg %p68
      %p165 = pneg %p65
      %p166 = pneg %p89
      %p167 = pneg %p86
      %p168 = pneg %p117
      %p169 = pneg %p114
      %s170 = smul.u32 8, %s19
      %p171 = scmp.lt.s32.totalorder %s18, 1
      %s172 = scalar_select %p171, %s18, 1
      %p173 = scmp.lt.s32.totalorder %s170, 15
      %s174 = scalar_select %p173, %s170, 15
      %s175 = smul.addr %s174, 2
      %s176 = smul.addr %s172, 32
      %s177 = sadd.s32 %s175, %s176
      %s178 = smul.addr %s177, 8
      %s179 = scalar_lea.vmem %s3, %s178
      %p180 = scmp.lt.s32.totalorder %s18, 1
      %s181 = scalar_select %p180, %s18, 1
      %s182 = smul.addr %s181, 54
      %s183 = smul.addr %s182, 4
      %s184 = scalar_lea.vmem %s0, %s183
      %s185 = smul.u32 8, %s19
      %p186 = scmp.lt.s32.totalorder %s18, 1
      %s187 = scalar_select %p186, %s18, 1
      %p188 = scmp.lt.s32.totalorder %s185, 15
      %s189 = scalar_select %p188, %s185, 15
      %s190 = smul.addr %s189, 2
      %s191 = smul.addr %s187, 32
      %s192 = sadd.s32 %s190, %s191
      %s193 = smul.addr %s192, 8
      %s194 = scalar_lea.vmem %s3, %s193
      %s195 = smul.u32 8, %s19
      %s197 = smul.u32 %s19, 8
      %s198 = smul.u32 %s197, 3
      %s199 = smul.addr %s198, 4
      %s200 = scalar_lea.vmem %s184, %s199
      %v201 = vld [vmem:[%s200] sm:$0xf]
      %v202 = vld [vmem:[%s200 + $0x4] sm:$0xf]
      %v203 = vld [vmem:[%s200 + $0xc] sm:$0xf]
      %v204 = vld [vmem:[%s200 + $0x10] sm:$0xf]
      %v205 = vld [vmem:[%s200 + $0x18] sm:$0xf]
      %v206 = vld [vmem:[%s200 + $0x1c] sm:$0xf]
      %v207 = vld [vmem:[%s200 + $0x24] sm:$0xf]
      %v208 = vld [vmem:[%s200 + $0x28] sm:$0xf]
      %v209 = vld [vmem:[%s200 + $0x30] sm:$0xf]
      %v210 = vld [vmem:[%s200 + $0x34] sm:$0xf]
      %v211 = vld [vmem:[%s200 + $0x3c] sm:$0xf]
      %v212 = vld [vmem:[%s200 + $0x40] sm:$0xf]
      %v213 = vld [vmem:[%s200 + $0x48] sm:$0xf]
      %v214 = vld [vmem:[%s200 + $0x4c] sm:$0xf]
      %v215 = vld [vmem:[%s200 + $0x54] sm:$0xf]
      %v216 = vld [vmem:[%s200 + $0x58] sm:$0xf]
      %v217 = vld [vmem:[%s1] sm:$0x3]
      %v218 = vld [vmem:[%s200 + $0x8] sm:$0x1]
      %v219 = vld [vmem:[%s200 + $0x14] sm:$0x1]
      %v220 = vld [vmem:[%s200 + $0x20] sm:$0x1]
      %v221 = vld [vmem:[%s200 + $0x2c] sm:$0x1]
      %v222 = vld [vmem:[%s200 + $0x38] sm:$0x1]
      %v223 = vld [vmem:[%s200 + $0x44] sm:$0x1]
      %v224 = vld [vmem:[%s200 + $0x50] sm:$0x1]
      %v225 = vld [vmem:[%s200 + $0x5c] sm:$0x1]
      %vm226 = vsmask.f32 3328
      %vm227 = vsmask.f32 7440
      %vm228 = vmor %vm226, %vm227
      %v230 = vshrl.u32 %v201, 16
      %v232 = vrot.slane %v230, 4
      %v233 = vshll.u32 %v201, 16
      %v235 = vrot.slane %v233, 5
      %v236 = vor.u32 %v232, %v235
      %v237 = vrot.slane %v236, 4
      %v239 = vshll.u32 %v202, 16
      %v241 = vrot.slane %v239, 5
      %v242 = vsel %vm228, %v237, %v241
      %v243 = vshrl.u32 %v202, 16
      %v245 = vrot.slane %v243, 4
      %v246 = vor.u32 %v245, %v241
      %v247 = vrot.slane %v246, 4
      %v249 = vshll.u32 %v218, 16
      %v251 = vrot.slane %v249, 5
      %v252 = vsel %vm228, %v247, %v251
      %v254 = vshrl.u32 %v203, 16
      %v256 = vrot.slane %v254, 4
      %v257 = vshll.u32 %v203, 16
      %v259 = vrot.slane %v257, 5
      %v260 = vor.u32 %v256, %v259
      %v261 = vrot.slane %v260, 4
      %v263 = vshll.u32 %v204, 16
      %v265 = vrot.slane %v263, 5
      %v266 = vsel %vm228, %v261, %v265
      %v267 = vshrl.u32 %v204, 16
      %v269 = vrot.slane %v267, 4
      %v270 = vor.u32 %v269, %v265
      %v271 = vrot.slane %v270, 4
      %v273 = vshll.u32 %v219, 16
      %v275 = vrot.slane %v273, 5
      %v276 = vsel %vm228, %v271, %v275
      %v278 = vshrl.u32 %v205, 16
      %v280 = vrot.slane %v278, 4
      %v281 = vshll.u32 %v205, 16
      %v283 = vrot.slane %v281, 5
      %v284 = vor.u32 %v280, %v283
      %v285 = vrot.slane %v284, 4
      %v287 = vshll.u32 %v206, 16
      %v289 = vrot.slane %v287, 5
      %v290 = vsel %vm228, %v285, %v289
      %v291 = vshrl.u32 %v206, 16
      %v293 = vrot.slane %v291, 4
      %v294 = vor.u32 %v293, %v289
      %v295 = vrot.slane %v294, 4
      %v297 = vshll.u32 %v220, 16
      %v299 = vrot.slane %v297, 5
      %v300 = vsel %vm228, %v295, %v299
      %v302 = vshrl.u32 %v207, 16
      %v304 = vrot.slane %v302, 4
      %v305 = vshll.u32 %v207, 16
      %v307 = vrot.slane %v305, 5
      %v308 = vor.u32 %v304, %v307
      %v309 = vrot.slane %v308, 4
      %v311 = vshll.u32 %v208, 16
      %v313 = vrot.slane %v311, 5
      %v314 = vsel %vm228, %v309, %v313
      %v315 = vshrl.u32 %v208, 16
      %v317 = vrot.slane %v315, 4
      %v318 = vor.u32 %v317, %v313
      %v319 = vrot.slane %v318, 4
      %v321 = vshll.u32 %v221, 16
      %v323 = vrot.slane %v321, 5
      %v324 = vsel %vm228, %v319, %v323
      %v326 = vshrl.u32 %v209, 16
      %v328 = vrot.slane %v326, 4
      %v329 = vshll.u32 %v209, 16
      %v331 = vrot.slane %v329, 5
      %v332 = vor.u32 %v328, %v331
      %v333 = vrot.slane %v332, 4
      %v335 = vshll.u32 %v210, 16
      %v337 = vrot.slane %v335, 5
      %v338 = vsel %vm228, %v333, %v337
      %v339 = vshrl.u32 %v210, 16
      %v341 = vrot.slane %v339, 4
      %v342 = vor.u32 %v341, %v337
      %v343 = vrot.slane %v342, 4
      %v345 = vshll.u32 %v222, 16
      %v347 = vrot.slane %v345, 5
      %v348 = vsel %vm228, %v343, %v347
      %v350 = vshrl.u32 %v211, 16
      %v352 = vrot.slane %v350, 4
      %v353 = vshll.u32 %v211, 16
      %v355 = vrot.slane %v353, 5
      %v356 = vor.u32 %v352, %v355
      %v357 = vrot.slane %v356, 4
      %v359 = vshll.u32 %v212, 16
      %v361 = vrot.slane %v359, 5
      %v362 = vsel %vm228, %v357, %v361
      %v363 = vshrl.u32 %v212, 16
      %v365 = vrot.slane %v363, 4
      %v366 = vor.u32 %v365, %v361
      %v367 = vrot.slane %v366, 4
      %v369 = vshll.u32 %v223, 16
      %v371 = vrot.slane %v369, 5
      %v372 = vsel %vm228, %v367, %v371
      %v374 = vshrl.u32 %v213, 16
      %v376 = vrot.slane %v374, 4
      %v377 = vshll.u32 %v213, 16
      %v379 = vrot.slane %v377, 5
      %v380 = vor.u32 %v376, %v379
      %v381 = vrot.slane %v380, 4
      %v383 = vshll.u32 %v214, 16
      %v385 = vrot.slane %v383, 5
      %v386 = vsel %vm228, %v381, %v385
      %v387 = vshrl.u32 %v214, 16
      %v389 = vrot.slane %v387, 4
      %v390 = vor.u32 %v389, %v385
      %v391 = vrot.slane %v390, 4
      %v393 = vshll.u32 %v224, 16
      %v395 = vrot.slane %v393, 5
      %v396 = vsel %vm228, %v391, %v395
      %v398 = vshrl.u32 %v215, 16
      %v400 = vrot.slane %v398, 4
      %v401 = vshll.u32 %v215, 16
      %v403 = vrot.slane %v401, 5
      %v404 = vor.u32 %v400, %v403
      %v405 = vrot.slane %v404, 4
      %v407 = vshll.u32 %v216, 16
      %v409 = vrot.slane %v407, 5
      %v410 = vsel %vm228, %v405, %v409
      %v411 = vshrl.u32 %v216, 16
      %v413 = vrot.slane %v411, 4
      %v414 = vor.u32 %v413, %v409
      %v415 = vrot.slane %v414, 4
      %v417 = vshll.u32 %v225, 16
      %v419 = vrot.slane %v417, 5
      %v420 = vsel %vm228, %v415, %v419
      %s421 = scalar_lea.vmem %s1, 2
      %v422 = vld [vmem:[%s421] sm:$0x3]
      %v423 = vunpack.c.l.b16 %v242
      %v424 = vunpack.c.l.b16 %v252
      %v425 = vunpack.c.l.b16 %v266
      %v426 = vunpack.c.l.b16 %v276
      %v427 = vunpack.c.l.b16 %v290
      %v428 = vunpack.c.l.b16 %v300
      %v429 = vunpack.c.l.b16 %v314
      %v430 = vunpack.c.l.b16 %v324
      %v431 = vunpack.c.l.b16 %v338
      %v432 = vunpack.c.l.b16 %v348
      %v433 = vunpack.c.l.b16 %v362
      %v434 = vunpack.c.l.b16 %v372
      %v435 = vunpack.c.l.b16 %v386
      %v436 = vunpack.c.l.b16 %v396
      %v437 = vunpack.c.l.b16 %v410
      %v438 = vunpack.c.l.b16 %v420
      %v439 = vpack.c.b16 %v424, %v423
      %v440 = vpack.c.b16 %v426, %v425
      %v441 = vpack.c.b16 %v428, %v427
      %v442 = vpack.c.b16 %v430, %v429
      %v443 = vpack.c.b16 %v432, %v431
      %v444 = vpack.c.b16 %v434, %v433
      %v445 = vpack.c.b16 %v436, %v435
      %v446 = vpack.c.b16 %v438, %v437
      %vm447 = vcmask 31744
      %v449 = vsel %vm447, %v439, 0
      %v452 = vsel %vm447, %v440, 0
      %v455 = vsel %vm447, %v441, 0
      %v458 = vsel %vm447, %v442, 0
      %v461 = vsel %vm447, %v443, 0
      %v464 = vsel %vm447, %v444, 0
      %v467 = vsel %vm447, %v445, 0
      %v470 = vsel %vm447, %v446, 0
      %vm472 = vcmask 1041408
      %v474 = vsel %vm472, %v422, 0
      %476 = vmatpush.bf16.msra.mxu0 0
      %477 = vmatpush.bf16.msra.mxu0 0
      %478 = vmatpush.bf16.msra.mxu0 0
      %479 = vmatpush.bf16.msra.mxu0 0
      %480 = vmatpush.bf16.msra.mxu0 0
      %481 = vmatpush.bf16.msra.mxu0 0
      %482 = vmatpush.bf16.msra.mxu0 0
      %483 = vmatpush.bf16.msra.mxu0 %v474
      %484 = vmatmul.bf16.gmra.mxu0 %v449
      %v485 = vpop.f32.mrf.mxu0
      %v486 = vadd.f32 0.0, %v485
      %v487 = vpop.f32.mrf.mxu0
      %v488 = vadd.f32 0.0, %v487
      %489 = vmatmul.bf16.gmra.mxu0 %v452
      %v490 = vpop.f32.mrf.mxu0
      %v491 = vadd.f32 0.0, %v490
      %v492 = vpop.f32.mrf.mxu0
      %v493 = vadd.f32 0.0, %v492
      %494 = vmatmul.bf16.gmra.mxu0 %v455
      %v495 = vpop.f32.mrf.mxu0
      %v496 = vadd.f32 0.0, %v495
      %v497 = vpop.f32.mrf.mxu0
      %v498 = vadd.f32 0.0, %v497
      %499 = vmatmul.bf16.gmra.mxu0 %v458
      %v500 = vpop.f32.mrf.mxu0
      %v501 = vadd.f32 0.0, %v500
      %v502 = vpop.f32.mrf.mxu0
      %v503 = vadd.f32 0.0, %v502
      %504 = vmatmul.bf16.gmra.mxu0 %v461
      %v505 = vpop.f32.mrf.mxu0
      %v506 = vadd.f32 0.0, %v505
      %v507 = vpop.f32.mrf.mxu0
      %v508 = vadd.f32 0.0, %v507
      %509 = vmatmul.bf16.gmra.mxu0 %v464
      %v510 = vpop.f32.mrf.mxu0
      %v511 = vadd.f32 0.0, %v510
      %v512 = vpop.f32.mrf.mxu0
      %v513 = vadd.f32 0.0, %v512
      %514 = vmatmul.bf16.gmra.mxu0 %v467
      %v515 = vpop.f32.mrf.mxu0
      %v516 = vadd.f32 0.0, %v515
      %v517 = vpop.f32.mrf.mxu0
      %v518 = vadd.f32 0.0, %v517
      %519 = vmatmul.bf16.gmra.mxu0 %v470
      %v520 = vpop.f32.mrf.mxu0
      %v521 = vadd.f32 0.0, %v520
      %v522 = vpop.f32.mrf.mxu0
      %v523 = vadd.f32 0.0, %v522
      %524 = vdwg.mxu0
      %v541 = vunpack.c.l.b16 %v201
      %v542 = vunpack.c.l.b16 %v202
      %v543 = vunpack.c.l.b16 %v203
      %v544 = vunpack.c.l.b16 %v204
      %v545 = vunpack.c.l.b16 %v205
      %v546 = vunpack.c.l.b16 %v206
      %v547 = vunpack.c.l.b16 %v207
      %v548 = vunpack.c.l.b16 %v208
      %v549 = vunpack.c.l.b16 %v209
      %v550 = vunpack.c.l.b16 %v210
      %v551 = vunpack.c.l.b16 %v211
      %v552 = vunpack.c.l.b16 %v212
      %v553 = vunpack.c.l.b16 %v213
      %v554 = vunpack.c.l.b16 %v214
      %v555 = vunpack.c.l.b16 %v215
      %v556 = vunpack.c.l.b16 %v216
      %v557 = vpack.c.b16 %v542, %v541
      %v558 = vpack.c.b16 %v544, %v543
      %v559 = vpack.c.b16 %v546, %v545
      %v560 = vpack.c.b16 %v548, %v547
      %v561 = vpack.c.b16 %v550, %v549
      %v562 = vpack.c.b16 %v552, %v551
      %v563 = vpack.c.b16 %v554, %v553
      %v564 = vpack.c.b16 %v556, %v555
      %v566 = vsel %vm447, %v557, 0
      %v569 = vsel %vm447, %v558, 0
      %v572 = vsel %vm447, %v559, 0
      %v575 = vsel %vm447, %v560, 0
      %v578 = vsel %vm447, %v561, 0
      %v581 = vsel %vm447, %v562, 0
      %v584 = vsel %vm447, %v563, 0
      %v587 = vsel %vm447, %v564, 0
      %v590 = vsel %vm472, %v217, 0
      %592 = vmatpush.bf16.msra.mxu0 0
      %593 = vmatpush.bf16.msra.mxu0 0
      %594 = vmatpush.bf16.msra.mxu0 0
      %595 = vmatpush.bf16.msra.mxu0 0
      %596 = vmatpush.bf16.msra.mxu0 0
      %597 = vmatpush.bf16.msra.mxu0 0
      %598 = vmatpush.bf16.msra.mxu0 0
      %599 = vmatpush.bf16.msra.mxu0 %v590
      %600 = vmatmul.bf16.gmra.mxu0 %v566
      %v601 = vpop.f32.mrf.mxu0
      %v602 = vadd.f32 %v486, %v601
      %v603 = vpop.f32.mrf.mxu0
      %v604 = vadd.f32 %v488, %v603
      %605 = vmatmul.bf16.gmra.mxu0 %v569
      %v606 = vpop.f32.mrf.mxu0
      %v607 = vadd.f32 %v491, %v606
      %v608 = vpop.f32.mrf.mxu0
      %v609 = vadd.f32 %v493, %v608
      %610 = vmatmul.bf16.gmra.mxu0 %v572
      %v611 = vpop.f32.mrf.mxu0
      %v612 = vadd.f32 %v496, %v611
      %v613 = vpop.f32.mrf.mxu0
      %v614 = vadd.f32 %v498, %v613
      %615 = vmatmul.bf16.gmra.mxu0 %v575
      %v616 = vpop.f32.mrf.mxu0
      %v617 = vadd.f32 %v501, %v616
      %v618 = vpop.f32.mrf.mxu0
      %v619 = vadd.f32 %v503, %v618
      %620 = vmatmul.bf16.gmra.mxu0 %v578
      %v621 = vpop.f32.mrf.mxu0
      %v622 = vadd.f32 %v506, %v621
      %v623 = vpop.f32.mrf.mxu0
      %v624 = vadd.f32 %v508, %v623
      %625 = vmatmul.bf16.gmra.mxu0 %v581
      %v626 = vpop.f32.mrf.mxu0
      %v627 = vadd.f32 %v511, %v626
      %v628 = vpop.f32.mrf.mxu0
      %v629 = vadd.f32 %v513, %v628
      %630 = vmatmul.bf16.gmra.mxu0 %v584
      %v631 = vpop.f32.mrf.mxu0
      %v632 = vadd.f32 %v516, %v631
      %v633 = vpop.f32.mrf.mxu0
      %v634 = vadd.f32 %v518, %v633
      %635 = vmatmul.bf16.gmra.mxu0 %v587
      %v636 = vpop.f32.mrf.mxu0
      %v637 = vadd.f32 %v521, %v636
      %v638 = vpop.f32.mrf.mxu0
      %v639 = vadd.f32 %v523, %v638
      %640 = vdwg.mxu0
      %v641 = vld [vmem:[%s200] sm:$0xe]
      %v642 = vld [vmem:[%s200 + $0xc] sm:$0xe]
      %v643 = vld [vmem:[%s200 + $0x18] sm:$0xe]
      %v644 = vld [vmem:[%s200 + $0x24] sm:$0xe]
      %v645 = vld [vmem:[%s200 + $0x30] sm:$0xe]
      %v646 = vld [vmem:[%s200 + $0x3c] sm:$0xe]
      %v647 = vld [vmem:[%s200 + $0x48] sm:$0xe]
      %v648 = vld [vmem:[%s200 + $0x54] sm:$0xe]
      %vm665 = vcmask 1042432
      %vm666 = vcmask 1046532
      %vm667 = vmor %vm665, %vm666
      %v668 = vrot.slane %v641, 5
      %v669 = vrot.slane %v668, 4
      %v670 = vrot.slane %v202, 5
      %v671 = vsel %vm667, %v669, %v670
      %v672 = vrot.slane %v670, 4
      %v673 = vrot.slane %v218, 5
      %v674 = vsel %vm667, %v672, %v673
      %v675 = vrot.slane %v642, 5
      %v676 = vrot.slane %v675, 4
      %v677 = vrot.slane %v204, 5
      %v678 = vsel %vm667, %v676, %v677
      %v679 = vrot.slane %v677, 4
      %v680 = vrot.slane %v219, 5
      %v681 = vsel %vm667, %v679, %v680
      %v682 = vrot.slane %v643, 5
      %v683 = vrot.slane %v682, 4
      %v684 = vrot.slane %v206, 5
      %v685 = vsel %vm667, %v683, %v684
      %v686 = vrot.slane %v684, 4
      %v687 = vrot.slane %v220, 5
      %v688 = vsel %vm667, %v686, %v687
      %v689 = vrot.slane %v644, 5
      %v690 = vrot.slane %v689, 4
      %v691 = vrot.slane %v208, 5
      %v692 = vsel %vm667, %v690, %v691
      %v693 = vrot.slane %v691, 4
      %v694 = vrot.slane %v221, 5
      %v695 = vsel %vm667, %v693, %v694
      %v696 = vrot.slane %v645, 5
      %v697 = vrot.slane %v696, 4
      %v698 = vrot.slane %v210, 5
      %v699 = vsel %vm667, %v697, %v698
      %v700 = vrot.slane %v698, 4
      %v701 = vrot.slane %v222, 5
      %v702 = vsel %vm667, %v700, %v701
      %v703 = vrot.slane %v646, 5
      %v704 = vrot.slane %v703, 4
      %v705 = vrot.slane %v212, 5
      %v706 = vsel %vm667, %v704, %v705
      %v707 = vrot.slane %v705, 4
      %v708 = vrot.slane %v223, 5
      %v709 = vsel %vm667, %v707, %v708
      %v710 = vrot.slane %v647, 5
      %v711 = vrot.slane %v710, 4
      %v712 = vrot.slane %v214, 5
      %v713 = vsel %vm667, %v711, %v712
      %v714 = vrot.slane %v712, 4
      %v715 = vrot.slane %v224, 5
      %v716 = vsel %vm667, %v714, %v715
      %v717 = vrot.slane %v648, 5
      %v718 = vrot.slane %v717, 4
      %v719 = vrot.slane %v216, 5
      %v720 = vsel %vm667, %v718, %v719
      %v721 = vrot.slane %v719, 4
      %v722 = vrot.slane %v225, 5
      %v723 = vsel %vm667, %v721, %v722
      %s724 = scalar_lea.vmem %s1, 4
      %v725 = vld [vmem:[%s724] sm:$0x3]
      %v726 = vunpack.c.l.b16 %v671
      %v727 = vunpack.c.l.b16 %v674
      %v728 = vunpack.c.l.b16 %v678
      %v729 = vunpack.c.l.b16 %v681
      %v730 = vunpack.c.l.b16 %v685
      %v731 = vunpack.c.l.b16 %v688
      %v732 = vunpack.c.l.b16 %v692
      %v733 = vunpack.c.l.b16 %v695
      %v734 = vunpack.c.l.b16 %v699
      %v735 = vunpack.c.l.b16 %v702
      %v736 = vunpack.c.l.b16 %v706
      %v737 = vunpack.c.l.b16 %v709
      %v738 = vunpack.c.l.b16 %v713
      %v739 = vunpack.c.l.b16 %v716
      %v740 = vunpack.c.l.b16 %v720
      %v741 = vunpack.c.l.b16 %v723
      %v742 = vpack.c.b16 %v727, %v726
      %v743 = vpack.c.b16 %v729, %v728
      %v744 = vpack.c.b16 %v731, %v730
      %v745 = vpack.c.b16 %v733, %v732
      %v746 = vpack.c.b16 %v735, %v734
      %v747 = vpack.c.b16 %v737, %v736
      %v748 = vpack.c.b16 %v739, %v738
      %v749 = vpack.c.b16 %v741, %v740
      %v751 = vsel %vm447, %v742, 0
      %v754 = vsel %vm447, %v743, 0
      %v757 = vsel %vm447, %v744, 0
      %v760 = vsel %vm447, %v745, 0
      %v763 = vsel %vm447, %v746, 0
      %v766 = vsel %vm447, %v747, 0
      %v769 = vsel %vm447, %v748, 0
      %v772 = vsel %vm447, %v749, 0
      %v775 = vsel %vm472, %v725, 0
      %777 = vmatpush.bf16.msra.mxu0 0
      %778 = vmatpush.bf16.msra.mxu0 0
      %779 = vmatpush.bf16.msra.mxu0 0
      %780 = vmatpush.bf16.msra.mxu0 0
      %781 = vmatpush.bf16.msra.mxu0 0
      %782 = vmatpush.bf16.msra.mxu0 0
      %783 = vmatpush.bf16.msra.mxu0 0
      %784 = vmatpush.bf16.msra.mxu0 %v775
      %785 = vmatmul.bf16.gmra.mxu0 %v751
      %v786 = vpop.f32.mrf.mxu0
      %v787 = vadd.f32 0.0, %v786
      %v788 = vpop.f32.mrf.mxu0
      %v789 = vadd.f32 0.0, %v788
      %790 = vmatmul.bf16.gmra.mxu0 %v754
      %v791 = vpop.f32.mrf.mxu0
      %v792 = vadd.f32 0.0, %v791
      %v793 = vpop.f32.mrf.mxu0
      %v794 = vadd.f32 0.0, %v793
      %795 = vmatmul.bf16.gmra.mxu0 %v757
      %v796 = vpop.f32.mrf.mxu0
      %v797 = vadd.f32 0.0, %v796
      %v798 = vpop.f32.mrf.mxu0
      %v799 = vadd.f32 0.0, %v798
      %800 = vmatmul.bf16.gmra.mxu0 %v760
      %v801 = vpop.f32.mrf.mxu0
      %v802 = vadd.f32 0.0, %v801
      %v803 = vpop.f32.mrf.mxu0
      %v804 = vadd.f32 0.0, %v803
      %805 = vmatmul.bf16.gmra.mxu0 %v763
      %v806 = vpop.f32.mrf.mxu0
      %v807 = vadd.f32 0.0, %v806
      %v808 = vpop.f32.mrf.mxu0
      %v809 = vadd.f32 0.0, %v808
      %810 = vmatmul.bf16.gmra.mxu0 %v766
      %v811 = vpop.f32.mrf.mxu0
      %v812 = vadd.f32 0.0, %v811
      %v813 = vpop.f32.mrf.mxu0
      %v814 = vadd.f32 0.0, %v813
      %815 = vmatmul.bf16.gmra.mxu0 %v769
      %v816 = vpop.f32.mrf.mxu0
      %v817 = vadd.f32 0.0, %v816
      %v818 = vpop.f32.mrf.mxu0
      %v819 = vadd.f32 0.0, %v818
      %820 = vmatmul.bf16.gmra.mxu0 %v772
      %v821 = vpop.f32.mrf.mxu0
      %v822 = vadd.f32 0.0, %v821
      %v823 = vpop.f32.mrf.mxu0
      %v824 = vadd.f32 0.0, %v823
      %825 = vdwg.mxu0
      %v826 = vadd.f32 %v602, %v787
      %v827 = vadd.f32 %v604, %v789
      %v828 = vadd.f32 %v607, %v792
      %v829 = vadd.f32 %v609, %v794
      %v830 = vadd.f32 %v612, %v797
      %v831 = vadd.f32 %v614, %v799
      %v832 = vadd.f32 %v617, %v802
      %v833 = vadd.f32 %v619, %v804
      %v834 = vadd.f32 %v622, %v807
      %v835 = vadd.f32 %v624, %v809
      %v836 = vadd.f32 %v627, %v812
      %v837 = vadd.f32 %v629, %v814
      %v838 = vadd.f32 %v632, %v817
      %v839 = vadd.f32 %v634, %v819
      %v840 = vadd.f32 %v637, %v822
      %v841 = vadd.f32 %v639, %v824
      %s842 = sadd.s32 %s197, 1
      %s843 = smul.u32 %s842, 3
      %s844 = smul.addr %s843, 4
      %s845 = scalar_lea.vmem %s184, %s844
      %v846 = vld [vmem:[%s845] sm:$0xf]
      %v847 = vld [vmem:[%s845 + $0x4] sm:$0xf]
      %v848 = vld [vmem:[%s845 + $0xc] sm:$0xf]
      %v849 = vld [vmem:[%s845 + $0x10] sm:$0xf]
      %v850 = vld [vmem:[%s845 + $0x18] sm:$0xf]
      %v851 = vld [vmem:[%s845 + $0x1c] sm:$0xf]
      %v852 = vld [vmem:[%s845 + $0x24] sm:$0xf]
      %v853 = vld [vmem:[%s845 + $0x28] sm:$0xf]
      %v854 = vld [vmem:[%s845 + $0x30] sm:$0xf]
      %v855 = vld [vmem:[%s845 + $0x34] sm:$0xf]
      %v856 = vld [vmem:[%s845 + $0x3c] sm:$0xf]
      %v857 = vld [vmem:[%s845 + $0x40] sm:$0xf]
      %v858 = vld [vmem:[%s845 + $0x48] sm:$0xf]
      %v859 = vld [vmem:[%s845 + $0x4c] sm:$0xf]
      %v860 = vld [vmem:[%s845 + $0x54] sm:$0xf]
      %v861 = vld [vmem:[%s845 + $0x58] sm:$0xf]
      %s862 = scalar_lea.vmem %s1, 6
      %v863 = vld [vmem:[%s862] sm:$0x3]
      %v880 = vunpack.c.l.b16 %v846
      %v881 = vunpack.c.l.b16 %v847
      %v882 = vunpack.c.l.b16 %v848
      %v883 = vunpack.c.l.b16 %v849
      %v884 = vunpack.c.l.b16 %v850
      %v885 = vunpack.c.l.b16 %v851
      %v886 = vunpack.c.l.b16 %v852
      %v887 = vunpack.c.l.b16 %v853
      %v888 = vunpack.c.l.b16 %v854
      %v889 = vunpack.c.l.b16 %v855
      %v890 = vunpack.c.l.b16 %v856
      %v891 = vunpack.c.l.b16 %v857
      %v892 = vunpack.c.l.b16 %v858
      %v893 = vunpack.c.l.b16 %v859
      %v894 = vunpack.c.l.b16 %v860
      %v895 = vunpack.c.l.b16 %v861
      %v896 = vpack.c.b16 %v881, %v880
      %v897 = vpack.c.b16 %v883, %v882
      %v898 = vpack.c.b16 %v885, %v884
      %v899 = vpack.c.b16 %v887, %v886
      %v900 = vpack.c.b16 %v889, %v888
      %v901 = vpack.c.b16 %v891, %v890
      %v902 = vpack.c.b16 %v893, %v892
      %v903 = vpack.c.b16 %v895, %v894
      %v905 = vsel %vm447, %v896, 0
      %v908 = vsel %vm447, %v897, 0
      %v911 = vsel %vm447, %v898, 0
      %v914 = vsel %vm447, %v899, 0
      %v917 = vsel %vm447, %v900, 0
      %v920 = vsel %vm447, %v901, 0
      %v923 = vsel %vm447, %v902, 0
      %v926 = vsel %vm447, %v903, 0
      %v929 = vsel %vm472, %v863, 0
      %931 = vmatpush.bf16.msra.mxu0 0
      %932 = vmatpush.bf16.msra.mxu0 0
      %933 = vmatpush.bf16.msra.mxu0 0
      %934 = vmatpush.bf16.msra.mxu0 0
      %935 = vmatpush.bf16.msra.mxu0 0
      %936 = vmatpush.bf16.msra.mxu0 0
      %937 = vmatpush.bf16.msra.mxu0 0
      %938 = vmatpush.bf16.msra.mxu0 %v929
      %939 = vmatmul.bf16.gmra.mxu0 %v905
      %v940 = vpop.f32.mrf.mxu0
      %v941 = vadd.f32 0.0, %v940
      %v942 = vpop.f32.mrf.mxu0
      %v943 = vadd.f32 0.0, %v942
      %944 = vmatmul.bf16.gmra.mxu0 %v908
      %v945 = vpop.f32.mrf.mxu0
      %v946 = vadd.f32 0.0, %v945
      %v947 = vpop.f32.mrf.mxu0
      %v948 = vadd.f32 0.0, %v947
      %949 = vmatmul.bf16.gmra.mxu0 %v911
      %v950 = vpop.f32.mrf.mxu0
      %v951 = vadd.f32 0.0, %v950
      %v952 = vpop.f32.mrf.mxu0
      %v953 = vadd.f32 0.0, %v952
      %954 = vmatmul.bf16.gmra.mxu0 %v914
      %v955 = vpop.f32.mrf.mxu0
      %v956 = vadd.f32 0.0, %v955
      %v957 = vpop.f32.mrf.mxu0
      %v958 = vadd.f32 0.0, %v957
      %959 = vmatmul.bf16.gmra.mxu0 %v917
      %v960 = vpop.f32.mrf.mxu0
      %v961 = vadd.f32 0.0, %v960
      %v962 = vpop.f32.mrf.mxu0
      %v963 = vadd.f32 0.0, %v962
      %964 = vmatmul.bf16.gmra.mxu0 %v920
      %v965 = vpop.f32.mrf.mxu0
      %v966 = vadd.f32 0.0, %v965
      %v967 = vpop.f32.mrf.mxu0
      %v968 = vadd.f32 0.0, %v967
      %969 = vmatmul.bf16.gmra.mxu0 %v923
      %v970 = vpop.f32.mrf.mxu0
      %v971 = vadd.f32 0.0, %v970
      %v972 = vpop.f32.mrf.mxu0
      %v973 = vadd.f32 0.0, %v972
      %974 = vmatmul.bf16.gmra.mxu0 %v926
      %v975 = vpop.f32.mrf.mxu0
      %v976 = vadd.f32 0.0, %v975
      %v977 = vpop.f32.mrf.mxu0
      %v978 = vadd.f32 0.0, %v977
      %979 = vdwg.mxu0
      %v980 = vadd.f32 %v826, %v941
      %v981 = vadd.f32 %v827, %v943
      %v982 = vadd.f32 %v828, %v946
      %v983 = vadd.f32 %v829, %v948
      %v984 = vadd.f32 %v830, %v951
      %v985 = vadd.f32 %v831, %v953
      %v986 = vadd.f32 %v832, %v956
      %v987 = vadd.f32 %v833, %v958
      %v988 = vadd.f32 %v834, %v961
      %v989 = vadd.f32 %v835, %v963
      %v990 = vadd.f32 %v836, %v966
      %v991 = vadd.f32 %v837, %v968
      %v992 = vadd.f32 %v838, %v971
      %v993 = vadd.f32 %v839, %v973
      %v994 = vadd.f32 %v840, %v976
      %v995 = vadd.f32 %v841, %v978
      %v996 = vld [vmem:[%s845] sm:$0xf]
      %v997 = vld [vmem:[%s845 + $0x4] sm:$0xf]
      %v998 = vld [vmem:[%s845 + $0x8] sm:$0x1]
      %v999 = vld [vmem:[%s845 + $0xc] sm:$0xf]
      %v1000 = vld [vmem:[%s845 + $0x10] sm:$0xf]
      %v1001 = vld [vmem:[%s845 + $0x14] sm:$0x1]
      %v1002 = vld [vmem:[%s845 + $0x18] sm:$0xf]
      %v1003 = vld [vmem:[%s845 + $0x1c] sm:$0xf]
      %v1004 = vld [vmem:[%s845 + $0x20] sm:$0x1]
      %v1005 = vld [vmem:[%s845 + $0x24] sm:$0xf]
      %v1006 = vld [vmem:[%s845 + $0x28] sm:$0xf]
      %v1007 = vld [vmem:[%s845 + $0x2c] sm:$0x1]
      %v1008 = vld [vmem:[%s845 + $0x30] sm:$0xf]
      %v1009 = vld [vmem:[%s845 + $0x34] sm:$0xf]
      %v1010 = vld [vmem:[%s845 + $0x38] sm:$0x1]
      %v1011 = vld [vmem:[%s845 + $0x3c] sm:$0xf]
      %v1012 = vld [vmem:[%s845 + $0x40] sm:$0xf]
      %v1013 = vld [vmem:[%s845 + $0x44] sm:$0x1]
      %v1014 = vld [vmem:[%s845 + $0x48] sm:$0xf]
      %v1015 = vld [vmem:[%s845 + $0x4c] sm:$0xf]
      %v1016 = vld [vmem:[%s845 + $0x50] sm:$0x1]
      %v1017 = vld [vmem:[%s845 + $0x54] sm:$0xf]
      %v1018 = vld [vmem:[%s845 + $0x58] sm:$0xf]
      %v1019 = vld [vmem:[%s845 + $0x5c] sm:$0x1]
      %v1021 = vshrl.u32 %v996, 16
      %v1023 = vrot.slane %v1021, 4
      %v1024 = vshll.u32 %v996, 16
      %v1026 = vrot.slane %v1024, 5
      %v1027 = vor.u32 %v1023, %v1026
      %v1028 = vrot.slane %v1027, 4
      %v1030 = vshll.u32 %v997, 16
      %v1032 = vrot.slane %v1030, 5
      %v1033 = vsel %vm228, %v1028, %v1032
      %v1034 = vshrl.u32 %v997, 16
      %v1036 = vrot.slane %v1034, 4
      %v1037 = vor.u32 %v1036, %v1032
      %v1038 = vrot.slane %v1037, 4
      %v1040 = vshll.u32 %v998, 16
      %v1042 = vrot.slane %v1040, 5
      %v1043 = vsel %vm228, %v1038, %v1042
      %v1045 = vshrl.u32 %v999, 16
      %v1047 = vrot.slane %v1045, 4
      %v1048 = vshll.u32 %v999, 16
      %v1050 = vrot.slane %v1048, 5
      %v1051 = vor.u32 %v1047, %v1050
      %v1052 = vrot.slane %v1051, 4
      %v1054 = vshll.u32 %v1000, 16
      %v1056 = vrot.slane %v1054, 5
      %v1057 = vsel %vm228, %v1052, %v1056
      %v1058 = vshrl.u32 %v1000, 16
      %v1060 = vrot.slane %v1058, 4
      %v1061 = vor.u32 %v1060, %v1056
      %v1062 = vrot.slane %v1061, 4
      %v1064 = vshll.u32 %v1001, 16
      %v1066 = vrot.slane %v1064, 5
      %v1067 = vsel %vm228, %v1062, %v1066
      %v1069 = vshrl.u32 %v1002, 16
      %v1071 = vrot.slane %v1069, 4
      %v1072 = vshll.u32 %v1002, 16
      %v1074 = vrot.slane %v1072, 5
      %v1075 = vor.u32 %v1071, %v1074
      %v1076 = vrot.slane %v1075, 4
      %v1078 = vshll.u32 %v1003, 16
      %v1080 = vrot.slane %v1078, 5
      %v1081 = vsel %vm228, %v1076, %v1080
      %v1082 = vshrl.u32 %v1003, 16
      %v1084 = vrot.slane %v1082, 4
      %v1085 = vor.u32 %v1084, %v1080
      %v1086 = vrot.slane %v1085, 4
      %v1088 = vshll.u32 %v1004, 16
      %v1090 = vrot.slane %v1088, 5
      %v1091 = vsel %vm228, %v1086, %v1090
      %v1093 = vshrl.u32 %v1005, 16
      %v1095 = vrot.slane %v1093, 4
      %v1096 = vshll.u32 %v1005, 16
      %v1098 = vrot.slane %v1096, 5
      %v1099 = vor.u32 %v1095, %v1098
      %v1100 = vrot.slane %v1099, 4
      %v1102 = vshll.u32 %v1006, 16
      %v1104 = vrot.slane %v1102, 5
      %v1105 = vsel %vm228, %v1100, %v1104
      %v1106 = vshrl.u32 %v1006, 16
      %v1108 = vrot.slane %v1106, 4
      %v1109 = vor.u32 %v1108, %v1104
      %v1110 = vrot.slane %v1109, 4
      %v1112 = vshll.u32 %v1007, 16
      %v1114 = vrot.slane %v1112, 5
      %v1115 = vsel %vm228, %v1110, %v1114
      %v1117 = vshrl.u32 %v1008, 16
      %v1119 = vrot.slane %v1117, 4
      %v1120 = vshll.u32 %v1008, 16
      %v1122 = vrot.slane %v1120, 5
      %v1123 = vor.u32 %v1119, %v1122
      %v1124 = vrot.slane %v1123, 4
      %v1126 = vshll.u32 %v1009, 16
      %v1128 = vrot.slane %v1126, 5
      %v1129 = vsel %vm228, %v1124, %v1128
      %v1130 = vshrl.u32 %v1009, 16
      %v1132 = vrot.slane %v1130, 4
      %v1133 = vor.u32 %v1132, %v1128
      %v1134 = vrot.slane %v1133, 4
      %v1136 = vshll.u32 %v1010, 16
      %v1138 = vrot.slane %v1136, 5
      %v1139 = vsel %vm228, %v1134, %v1138
      %v1141 = vshrl.u32 %v1011, 16
      %v1143 = vrot.slane %v1141, 4
      %v1144 = vshll.u32 %v1011, 16
      %v1146 = vrot.slane %v1144, 5
      %v1147 = vor.u32 %v1143, %v1146
      %v1148 = vrot.slane %v1147, 4
      %v1150 = vshll.u32 %v1012, 16
      %v1152 = vrot.slane %v1150, 5
      %v1153 = vsel %vm228, %v1148, %v1152
      %v1154 = vshrl.u32 %v1012, 16
      %v1156 = vrot.slane %v1154, 4
      %v1157 = vor.u32 %v1156, %v1152
      %v1158 = vrot.slane %v1157, 4
      %v1160 = vshll.u32 %v1013, 16
      %v1162 = vrot.slane %v1160, 5
      %v1163 = vsel %vm228, %v1158, %v1162
      %v1165 = vshrl.u32 %v1014, 16
      %v1167 = vrot.slane %v1165, 4
      %v1168 = vshll.u32 %v1014, 16
      %v1170 = vrot.slane %v1168, 5
      %v1171 = vor.u32 %v1167, %v1170
      %v1172 = vrot.slane %v1171, 4
      %v1174 = vshll.u32 %v1015, 16
      %v1176 = vrot.slane %v1174, 5
      %v1177 = vsel %vm228, %v1172, %v1176
      %v1178 = vshrl.u32 %v1015, 16
      %v1180 = vrot.slane %v1178, 4
      %v1181 = vor.u32 %v1180, %v1176
      %v1182 = vrot.slane %v1181, 4
      %v1184 = vshll.u32 %v1016, 16
      %v1186 = vrot.slane %v1184, 5
      %v1187 = vsel %vm228, %v1182, %v1186
      %v1189 = vshrl.u32 %v1017, 16
      %v1191 = vrot.slane %v1189, 4
      %v1192 = vshll.u32 %v1017, 16
      %v1194 = vrot.slane %v1192, 5
      %v1195 = vor.u32 %v1191, %v1194
      %v1196 = vrot.slane %v1195, 4
      %v1198 = vshll.u32 %v1018, 16
      %v1200 = vrot.slane %v1198, 5
      %v1201 = vsel %vm228, %v1196, %v1200
      %v1202 = vshrl.u32 %v1018, 16
      %v1204 = vrot.slane %v1202, 4
      %v1205 = vor.u32 %v1204, %v1200
      %v1206 = vrot.slane %v1205, 4
      %v1208 = vshll.u32 %v1019, 16
      %v1210 = vrot.slane %v1208, 5
      %v1211 = vsel %vm228, %v1206, %v1210
      %s1212 = scalar_lea.vmem %s1, 8
      %v1213 = vld [vmem:[%s1212] sm:$0x3]
      %v1214 = vunpack.c.l.b16 %v1033
      %v1215 = vunpack.c.l.b16 %v1043
      %v1216 = vunpack.c.l.b16 %v1057
      %v1217 = vunpack.c.l.b16 %v1067
      %v1218 = vunpack.c.l.b16 %v1081
      %v1219 = vunpack.c.l.b16 %v1091
      %v1220 = vunpack.c.l.b16 %v1105
      %v1221 = vunpack.c.l.b16 %v1115
      %v1222 = vunpack.c.l.b16 %v1129
      %v1223 = vunpack.c.l.b16 %v1139
      %v1224 = vunpack.c.l.b16 %v1153
      %v1225 = vunpack.c.l.b16 %v1163
      %v1226 = vunpack.c.l.b16 %v1177
      %v1227 = vunpack.c.l.b16 %v1187
      %v1228 = vunpack.c.l.b16 %v1201
      %v1229 = vunpack.c.l.b16 %v1211
      %v1230 = vpack.c.b16 %v1215, %v1214
      %v1231 = vpack.c.b16 %v1217, %v1216
      %v1232 = vpack.c.b16 %v1219, %v1218
      %v1233 = vpack.c.b16 %v1221, %v1220
      %v1234 = vpack.c.b16 %v1223, %v1222
      %v1235 = vpack.c.b16 %v1225, %v1224
      %v1236 = vpack.c.b16 %v1227, %v1226
      %v1237 = vpack.c.b16 %v1229, %v1228
      %v1239 = vsel %vm447, %v1230, 0
      %v1242 = vsel %vm447, %v1231, 0
      %v1245 = vsel %vm447, %v1232, 0
      %v1248 = vsel %vm447, %v1233, 0
      %v1251 = vsel %vm447, %v1234, 0
      %v1254 = vsel %vm447, %v1235, 0
      %v1257 = vsel %vm447, %v1236, 0
      %v1260 = vsel %vm447, %v1237, 0
      %v1263 = vsel %vm472, %v1213, 0
      %1265 = vmatpush.bf16.msra.mxu0 0
      %1266 = vmatpush.bf16.msra.mxu0 0
      %1267 = vmatpush.bf16.msra.mxu0 0
      %1268 = vmatpush.bf16.msra.mxu0 0
      %1269 = vmatpush.bf16.msra.mxu0 0
      %1270 = vmatpush.bf16.msra.mxu0 0
      %1271 = vmatpush.bf16.msra.mxu0 0
      %1272 = vmatpush.bf16.msra.mxu0 %v1263
      %1273 = vmatmul.bf16.gmra.mxu0 %v1239
      %v1274 = vpop.f32.mrf.mxu0
      %v1275 = vadd.f32 0.0, %v1274
      %v1276 = vpop.f32.mrf.mxu0
      %v1277 = vadd.f32 0.0, %v1276
      %1278 = vmatmul.bf16.gmra.mxu0 %v1242
      %v1279 = vpop.f32.mrf.mxu0
      %v1280 = vadd.f32 0.0, %v1279
      %v1281 = vpop.f32.mrf.mxu0
      %v1282 = vadd.f32 0.0, %v1281
      %1283 = vmatmul.bf16.gmra.mxu0 %v1245
      %v1284 = vpop.f32.mrf.mxu0
      %v1285 = vadd.f32 0.0, %v1284
      %v1286 = vpop.f32.mrf.mxu0
      %v1287 = vadd.f32 0.0, %v1286
      %1288 = vmatmul.bf16.gmra.mxu0 %v1248
      %v1289 = vpop.f32.mrf.mxu0
      %v1290 = vadd.f32 0.0, %v1289
      %v1291 = vpop.f32.mrf.mxu0
      %v1292 = vadd.f32 0.0, %v1291
      %1293 = vmatmul.bf16.gmra.mxu0 %v1251
      %v1294 = vpop.f32.mrf.mxu0
      %v1295 = vadd.f32 0.0, %v1294
      %v1296 = vpop.f32.mrf.mxu0
      %v1297 = vadd.f32 0.0, %v1296
      %1298 = vmatmul.bf16.gmra.mxu0 %v1254
      %v1299 = vpop.f32.mrf.mxu0
      %v1300 = vadd.f32 0.0, %v1299
      %v1301 = vpop.f32.mrf.mxu0
      %v1302 = vadd.f32 0.0, %v1301
      %1303 = vmatmul.bf16.gmra.mxu0 %v1257
      %v1304 = vpop.f32.mrf.mxu0
      %v1305 = vadd.f32 0.0, %v1304
      %v1306 = vpop.f32.mrf.mxu0
      %v1307 = vadd.f32 0.0, %v1306
      %1308 = vmatmul.bf16.gmra.mxu0 %v1260
      %v1309 = vpop.f32.mrf.mxu0
      %v1310 = vadd.f32 0.0, %v1309
      %v1311 = vpop.f32.mrf.mxu0
      %v1312 = vadd.f32 0.0, %v1311
      %1313 = vdwg.mxu0
      %v1314 = vadd.f32 %v980, %v1275
      %v1315 = vadd.f32 %v981, %v1277
      %v1316 = vadd.f32 %v982, %v1280
      %v1317 = vadd.f32 %v983, %v1282
      %v1318 = vadd.f32 %v984, %v1285
      %v1319 = vadd.f32 %v985, %v1287
      %v1320 = vadd.f32 %v986, %v1290
      %v1321 = vadd.f32 %v987, %v1292
      %v1322 = vadd.f32 %v988, %v1295
      %v1323 = vadd.f32 %v989, %v1297
      %v1324 = vadd.f32 %v990, %v1300
      %v1325 = vadd.f32 %v991, %v1302
      %v1326 = vadd.f32 %v992, %v1305
      %v1327 = vadd.f32 %v993, %v1307
      %v1328 = vadd.f32 %v994, %v1310
      %v1329 = vadd.f32 %v995, %v1312
      %v1330 = vld [vmem:[%s845] sm:$0xe]
      %v1331 = vld [vmem:[%s845 + $0xc] sm:$0xe]
      %v1332 = vld [vmem:[%s845 + $0x18] sm:$0xe]
      %v1333 = vld [vmem:[%s845 + $0x24] sm:$0xe]
      %v1334 = vld [vmem:[%s845 + $0x30] sm:$0xe]
      %v1335 = vld [vmem:[%s845 + $0x3c] sm:$0xe]
      %v1336 = vld [vmem:[%s845 + $0x48] sm:$0xe]
      %v1337 = vld [vmem:[%s845 + $0x54] sm:$0xe]
      %v1362 = vrot.slane %v1330, 5
      %v1363 = vrot.slane %v1362, 4
      %v1364 = vrot.slane %v997, 5
      %v1365 = vsel %vm667, %v1363, %v1364
      %v1366 = vrot.slane %v1364, 4
      %v1367 = vrot.slane %v998, 5
      %v1368 = vsel %vm667, %v1366, %v1367
      %v1369 = vrot.slane %v1331, 5
      %v1370 = vrot.slane %v1369, 4
      %v1371 = vrot.slane %v1000, 5
      %v1372 = vsel %vm667, %v1370, %v1371
      %v1373 = vrot.slane %v1371, 4
      %v1374 = vrot.slane %v1001, 5
      %v1375 = vsel %vm667, %v1373, %v1374
      %v1376 = vrot.slane %v1332, 5
      %v1377 = vrot.slane %v1376, 4
      %v1378 = vrot.slane %v1003, 5
      %v1379 = vsel %vm667, %v1377, %v1378
      %v1380 = vrot.slane %v1378, 4
      %v1381 = vrot.slane %v1004, 5
      %v1382 = vsel %vm667, %v1380, %v1381
      %v1383 = vrot.slane %v1333, 5
      %v1384 = vrot.slane %v1383, 4
      %v1385 = vrot.slane %v1006, 5
      %v1386 = vsel %vm667, %v1384, %v1385
      %v1387 = vrot.slane %v1385, 4
      %v1388 = vrot.slane %v1007, 5
      %v1389 = vsel %vm667, %v1387, %v1388
      %v1390 = vrot.slane %v1334, 5
      %v1391 = vrot.slane %v1390, 4
      %v1392 = vrot.slane %v1009, 5
      %v1393 = vsel %vm667, %v1391, %v1392
      %v1394 = vrot.slane %v1392, 4
      %v1395 = vrot.slane %v1010, 5
      %v1396 = vsel %vm667, %v1394, %v1395
      %v1397 = vrot.slane %v1335, 5
      %v1398 = vrot.slane %v1397, 4
      %v1399 = vrot.slane %v1012, 5
      %v1400 = vsel %vm667, %v1398, %v1399
      %v1401 = vrot.slane %v1399, 4
      %v1402 = vrot.slane %v1013, 5
      %v1403 = vsel %vm667, %v1401, %v1402
      %v1404 = vrot.slane %v1336, 5
      %v1405 = vrot.slane %v1404, 4
      %v1406 = vrot.slane %v1015, 5
      %v1407 = vsel %vm667, %v1405, %v1406
      %v1408 = vrot.slane %v1406, 4
      %v1409 = vrot.slane %v1016, 5
      %v1410 = vsel %vm667, %v1408, %v1409
      %v1411 = vrot.slane %v1337, 5
      %v1412 = vrot.slane %v1411, 4
      %v1413 = vrot.slane %v1018, 5
      %v1414 = vsel %vm667, %v1412, %v1413
      %v1415 = vrot.slane %v1413, 4
      %v1416 = vrot.slane %v1019, 5
      %v1417 = vsel %vm667, %v1415, %v1416
      %s1418 = scalar_lea.vmem %s1, 10
      %v1419 = vld [vmem:[%s1418] sm:$0x3]
      %v1420 = vunpack.c.l.b16 %v1365
      %v1421 = vunpack.c.l.b16 %v1368
      %v1422 = vunpack.c.l.b16 %v1372
      %v1423 = vunpack.c.l.b16 %v1375
      %v1424 = vunpack.c.l.b16 %v1379
      %v1425 = vunpack.c.l.b16 %v1382
      %v1426 = vunpack.c.l.b16 %v1386
      %v1427 = vunpack.c.l.b16 %v1389
      %v1428 = vunpack.c.l.b16 %v1393
      %v1429 = vunpack.c.l.b16 %v1396
      %v1430 = vunpack.c.l.b16 %v1400
      %v1431 = vunpack.c.l.b16 %v1403
      %v1432 = vunpack.c.l.b16 %v1407
      %v1433 = vunpack.c.l.b16 %v1410
      %v1434 = vunpack.c.l.b16 %v1414
      %v1435 = vunpack.c.l.b16 %v1417
      %v1436 = vpack.c.b16 %v1421, %v1420
      %v1437 = vpack.c.b16 %v1423, %v1422
      %v1438 = vpack.c.b16 %v1425, %v1424
      %v1439 = vpack.c.b16 %v1427, %v1426
      %v1440 = vpack.c.b16 %v1429, %v1428
      %v1441 = vpack.c.b16 %v1431, %v1430
      %v1442 = vpack.c.b16 %v1433, %v1432
      %v1443 = vpack.c.b16 %v1435, %v1434
      %v1445 = vsel %vm447, %v1436, 0
      %v1448 = vsel %vm447, %v1437, 0
      %v1451 = vsel %vm447, %v1438, 0
      %v1454 = vsel %vm447, %v1439, 0
      %v1457 = vsel %vm447, %v1440, 0
      %v1460 = vsel %vm447, %v1441, 0
      %v1463 = vsel %vm447, %v1442, 0
      %v1466 = vsel %vm447, %v1443, 0
      %v1469 = vsel %vm472, %v1419, 0
      %1471 = vmatpush.bf16.msra.mxu0 0
      %1472 = vmatpush.bf16.msra.mxu0 0
      %1473 = vmatpush.bf16.msra.mxu0 0
      %1474 = vmatpush.bf16.msra.mxu0 0
      %1475 = vmatpush.bf16.msra.mxu0 0
      %1476 = vmatpush.bf16.msra.mxu0 0
      %1477 = vmatpush.bf16.msra.mxu0 0
      %1478 = vmatpush.bf16.msra.mxu0 %v1469
      %1479 = vmatmul.bf16.gmra.mxu0 %v1445
      %v1480 = vpop.f32.mrf.mxu0
      %v1481 = vadd.f32 0.0, %v1480
      %v1482 = vpop.f32.mrf.mxu0
      %v1483 = vadd.f32 0.0, %v1482
      %1484 = vmatmul.bf16.gmra.mxu0 %v1448
      %v1485 = vpop.f32.mrf.mxu0
      %v1486 = vadd.f32 0.0, %v1485
      %v1487 = vpop.f32.mrf.mxu0
      %v1488 = vadd.f32 0.0, %v1487
      %1489 = vmatmul.bf16.gmra.mxu0 %v1451
      %v1490 = vpop.f32.mrf.mxu0
      %v1491 = vadd.f32 0.0, %v1490
      %v1492 = vpop.f32.mrf.mxu0
      %v1493 = vadd.f32 0.0, %v1492
      %1494 = vmatmul.bf16.gmra.mxu0 %v1454
      %v1495 = vpop.f32.mrf.mxu0
      %v1496 = vadd.f32 0.0, %v1495
      %v1497 = vpop.f32.mrf.mxu0
      %v1498 = vadd.f32 0.0, %v1497
      %1499 = vmatmul.bf16.gmra.mxu0 %v1457
      %v1500 = vpop.f32.mrf.mxu0
      %v1501 = vadd.f32 0.0, %v1500
      %v1502 = vpop.f32.mrf.mxu0
      %v1503 = vadd.f32 0.0, %v1502
      %1504 = vmatmul.bf16.gmra.mxu0 %v1460
      %v1505 = vpop.f32.mrf.mxu0
      %v1506 = vadd.f32 0.0, %v1505
      %v1507 = vpop.f32.mrf.mxu0
      %v1508 = vadd.f32 0.0, %v1507
      %1509 = vmatmul.bf16.gmra.mxu0 %v1463
      %v1510 = vpop.f32.mrf.mxu0
      %v1511 = vadd.f32 0.0, %v1510
      %v1512 = vpop.f32.mrf.mxu0
      %v1513 = vadd.f32 0.0, %v1512
      %1514 = vmatmul.bf16.gmra.mxu0 %v1466
      %v1515 = vpop.f32.mrf.mxu0
      %v1516 = vadd.f32 0.0, %v1515
      %v1517 = vpop.f32.mrf.mxu0
      %v1518 = vadd.f32 0.0, %v1517
      %1519 = vdwg.mxu0
      %v1520 = vadd.f32 %v1314, %v1481
      %v1521 = vadd.f32 %v1315, %v1483
      %v1522 = vadd.f32 %v1316, %v1486
      %v1523 = vadd.f32 %v1317, %v1488
      %v1524 = vadd.f32 %v1318, %v1491
      %v1525 = vadd.f32 %v1319, %v1493
      %v1526 = vadd.f32 %v1320, %v1496
      %v1527 = vadd.f32 %v1321, %v1498
      %v1528 = vadd.f32 %v1322, %v1501
      %v1529 = vadd.f32 %v1323, %v1503
      %v1530 = vadd.f32 %v1324, %v1506
      %v1531 = vadd.f32 %v1325, %v1508
      %v1532 = vadd.f32 %v1326, %v1511
      %v1533 = vadd.f32 %v1327, %v1513
      %v1534 = vadd.f32 %v1328, %v1516
      %v1535 = vadd.f32 %v1329, %v1518
      %s1536 = sadd.s32 %s197, 2
      %s1537 = smul.u32 %s1536, 3
      %s1538 = smul.addr %s1537, 4
      %s1539 = scalar_lea.vmem %s184, %s1538
      %v1540 = vld [vmem:[%s1539] sm:$0xf]
      %v1541 = vld [vmem:[%s1539 + $0x4] sm:$0xf]
      %v1542 = vld [vmem:[%s1539 + $0xc] sm:$0xf]
      %v1543 = vld [vmem:[%s1539 + $0x10] sm:$0xf]
      %v1544 = vld [vmem:[%s1539 + $0x18] sm:$0xf]
      %v1545 = vld [vmem:[%s1539 + $0x1c] sm:$0xf]
      %v1546 = vld [vmem:[%s1539 + $0x24] sm:$0xf]
      %v1547 = vld [vmem:[%s1539 + $0x28] sm:$0xf]
      %v1548 = vld [vmem:[%s1539 + $0x30] sm:$0xf]
      %v1549 = vld [vmem:[%s1539 + $0x34] sm:$0xf]
      %v1550 = vld [vmem:[%s1539 + $0x3c] sm:$0xf]
      %v1551 = vld [vmem:[%s1539 + $0x40] sm:$0xf]
      %v1552 = vld [vmem:[%s1539 + $0x48] sm:$0xf]
      %v1553 = vld [vmem:[%s1539 + $0x4c] sm:$0xf]
      %v1554 = vld [vmem:[%s1539 + $0x54] sm:$0xf]
      %v1555 = vld [vmem:[%s1539 + $0x58] sm:$0xf]
      %s1556 = scalar_lea.vmem %s1, 12
      %v1557 = vld [vmem:[%s1556] sm:$0x3]
      %v1574 = vunpack.c.l.b16 %v1540
      %v1575 = vunpack.c.l.b16 %v1541
      %v1576 = vunpack.c.l.b16 %v1542
      %v1577 = vunpack.c.l.b16 %v1543
      %v1578 = vunpack.c.l.b16 %v1544
      %v1579 = vunpack.c.l.b16 %v1545
      %v1580 = vunpack.c.l.b16 %v1546
      %v1581 = vunpack.c.l.b16 %v1547
      %v1582 = vunpack.c.l.b16 %v1548
      %v1583 = vunpack.c.l.b16 %v1549
      %v1584 = vunpack.c.l.b16 %v1550
      %v1585 = vunpack.c.l.b16 %v1551
      %v1586 = vunpack.c.l.b16 %v1552
      %v1587 = vunpack.c.l.b16 %v1553
      %v1588 = vunpack.c.l.b16 %v1554
      %v1589 = vunpack.c.l.b16 %v1555
      %v1590 = vpack.c.b16 %v1575, %v1574
      %v1591 = vpack.c.b16 %v1577, %v1576
      %v1592 = vpack.c.b16 %v1579, %v1578
      %v1593 = vpack.c.b16 %v1581, %v1580
      %v1594 = vpack.c.b16 %v1583, %v1582
      %v1595 = vpack.c.b16 %v1585, %v1584
      %v1596 = vpack.c.b16 %v1587, %v1586
      %v1597 = vpack.c.b16 %v1589, %v1588
      %v1599 = vsel %vm447, %v1590, 0
      %v1602 = vsel %vm447, %v1591, 0
      %v1605 = vsel %vm447, %v1592, 0
      %v1608 = vsel %vm447, %v1593, 0
      %v1611 = vsel %vm447, %v1594, 0
      %v1614 = vsel %vm447, %v1595, 0
      %v1617 = vsel %vm447, %v1596, 0
      %v1620 = vsel %vm447, %v1597, 0
      %v1623 = vsel %vm472, %v1557, 0
      %1625 = vmatpush.bf16.msra.mxu0 0
      %1626 = vmatpush.bf16.msra.mxu0 0
      %1627 = vmatpush.bf16.msra.mxu0 0
      %1628 = vmatpush.bf16.msra.mxu0 0
      %1629 = vmatpush.bf16.msra.mxu0 0
      %1630 = vmatpush.bf16.msra.mxu0 0
      %1631 = vmatpush.bf16.msra.mxu0 0
      %1632 = vmatpush.bf16.msra.mxu0 %v1623
      %1633 = vmatmul.bf16.gmra.mxu0 %v1599
      %v1634 = vpop.f32.mrf.mxu0
      %v1635 = vadd.f32 0.0, %v1634
      %v1636 = vpop.f32.mrf.mxu0
      %v1637 = vadd.f32 0.0, %v1636
      %1638 = vmatmul.bf16.gmra.mxu0 %v1602
      %v1639 = vpop.f32.mrf.mxu0
      %v1640 = vadd.f32 0.0, %v1639
      %v1641 = vpop.f32.mrf.mxu0
      %v1642 = vadd.f32 0.0, %v1641
      %1643 = vmatmul.bf16.gmra.mxu0 %v1605
      %v1644 = vpop.f32.mrf.mxu0
      %v1645 = vadd.f32 0.0, %v1644
      %v1646 = vpop.f32.mrf.mxu0
      %v1647 = vadd.f32 0.0, %v1646
      %1648 = vmatmul.bf16.gmra.mxu0 %v1608
      %v1649 = vpop.f32.mrf.mxu0
      %v1650 = vadd.f32 0.0, %v1649
      %v1651 = vpop.f32.mrf.mxu0
      %v1652 = vadd.f32 0.0, %v1651
      %1653 = vmatmul.bf16.gmra.mxu0 %v1611
      %v1654 = vpop.f32.mrf.mxu0
      %v1655 = vadd.f32 0.0, %v1654
      %v1656 = vpop.f32.mrf.mxu0
      %v1657 = vadd.f32 0.0, %v1656
      %1658 = vmatmul.bf16.gmra.mxu0 %v1614
      %v1659 = vpop.f32.mrf.mxu0
      %v1660 = vadd.f32 0.0, %v1659
      %v1661 = vpop.f32.mrf.mxu0
      %v1662 = vadd.f32 0.0, %v1661
      %1663 = vmatmul.bf16.gmra.mxu0 %v1617
      %v1664 = vpop.f32.mrf.mxu0
      %v1665 = vadd.f32 0.0, %v1664
      %v1666 = vpop.f32.mrf.mxu0
      %v1667 = vadd.f32 0.0, %v1666
      %1668 = vmatmul.bf16.gmra.mxu0 %v1620
      %v1669 = vpop.f32.mrf.mxu0
      %v1670 = vadd.f32 0.0, %v1669
      %v1671 = vpop.f32.mrf.mxu0
      %v1672 = vadd.f32 0.0, %v1671
      %1673 = vdwg.mxu0
      %v1674 = vadd.f32 %v1520, %v1635
      %v1675 = vadd.f32 %v1521, %v1637
      %v1676 = vadd.f32 %v1522, %v1640
      %v1677 = vadd.f32 %v1523, %v1642
      %v1678 = vadd.f32 %v1524, %v1645
      %v1679 = vadd.f32 %v1525, %v1647
      %v1680 = vadd.f32 %v1526, %v1650
      %v1681 = vadd.f32 %v1527, %v1652
      %v1682 = vadd.f32 %v1528, %v1655
      %v1683 = vadd.f32 %v1529, %v1657
      %v1684 = vadd.f32 %v1530, %v1660
      %v1685 = vadd.f32 %v1531, %v1662
      %v1686 = vadd.f32 %v1532, %v1665
      %v1687 = vadd.f32 %v1533, %v1667
      %v1688 = vadd.f32 %v1534, %v1670
      %v1689 = vadd.f32 %v1535, %v1672
      %v1690 = vld [vmem:[%s1539] sm:$0xf]
      %v1691 = vld [vmem:[%s1539 + $0x4] sm:$0xf]
      %v1692 = vld [vmem:[%s1539 + $0x8] sm:$0x1]
      %v1693 = vld [vmem:[%s1539 + $0xc] sm:$0xf]
      %v1694 = vld [vmem:[%s1539 + $0x10] sm:$0xf]
      %v1695 = vld [vmem:[%s1539 + $0x14] sm:$0x1]
      %v1696 = vld [vmem:[%s1539 + $0x18] sm:$0xf]
      %v1697 = vld [vmem:[%s1539 + $0x1c] sm:$0xf]
      %v1698 = vld [vmem:[%s1539 + $0x20] sm:$0x1]
      %v1699 = vld [vmem:[%s1539 + $0x24] sm:$0xf]
      %v1700 = vld [vmem:[%s1539 + $0x28] sm:$0xf]
      %v1701 = vld [vmem:[%s1539 + $0x2c] sm:$0x1]
      %v1702 = vld [vmem:[%s1539 + $0x30] sm:$0xf]
      %v1703 = vld [vmem:[%s1539 + $0x34] sm:$0xf]
      %v1704 = vld [vmem:[%s1539 + $0x38] sm:$0x1]
      %v1705 = vld [vmem:[%s1539 + $0x3c] sm:$0xf]
      %v1706 = vld [vmem:[%s1539 + $0x40] sm:$0xf]
      %v1707 = vld [vmem:[%s1539 + $0x44] sm:$0x1]
      %v1708 = vld [vmem:[%s1539 + $0x48] sm:$0xf]
      %v1709 = vld [vmem:[%s1539 + $0x4c] sm:$0xf]
      %v1710 = vld [vmem:[%s1539 + $0x50] sm:$0x1]
      %v1711 = vld [vmem:[%s1539 + $0x54] sm:$0xf]
      %v1712 = vld [vmem:[%s1539 + $0x58] sm:$0xf]
      %v1713 = vld [vmem:[%s1539 + $0x5c] sm:$0x1]
      %v1715 = vshrl.u32 %v1690, 16
      %v1717 = vrot.slane %v1715, 4
      %v1718 = vshll.u32 %v1690, 16
      %v1720 = vrot.slane %v1718, 5
      %v1721 = vor.u32 %v1717, %v1720
      %v1722 = vrot.slane %v1721, 4
      %v1724 = vshll.u32 %v1691, 16
      %v1726 = vrot.slane %v1724, 5
      %v1727 = vsel %vm228, %v1722, %v1726
      %v1728 = vshrl.u32 %v1691, 16
      %v1730 = vrot.slane %v1728, 4
      %v1731 = vor.u32 %v1730, %v1726
      %v1732 = vrot.slane %v1731, 4
      %v1734 = vshll.u32 %v1692, 16
      %v1736 = vrot.slane %v1734, 5
      %v1737 = vsel %vm228, %v1732, %v1736
      %v1739 = vshrl.u32 %v1693, 16
      %v1741 = vrot.slane %v1739, 4
      %v1742 = vshll.u32 %v1693, 16
      %v1744 = vrot.slane %v1742, 5
      %v1745 = vor.u32 %v1741, %v1744
      %v1746 = vrot.slane %v1745, 4
      %v1748 = vshll.u32 %v1694, 16
      %v1750 = vrot.slane %v1748, 5
      %v1751 = vsel %vm228, %v1746, %v1750
      %v1752 = vshrl.u32 %v1694, 16
      %v1754 = vrot.slane %v1752, 4
      %v1755 = vor.u32 %v1754, %v1750
      %v1756 = vrot.slane %v1755, 4
      %v1758 = vshll.u32 %v1695, 16
      %v1760 = vrot.slane %v1758, 5
      %v1761 = vsel %vm228, %v1756, %v1760
      %v1763 = vshrl.u32 %v1696, 16
      %v1765 = vrot.slane %v1763, 4
      %v1766 = vshll.u32 %v1696, 16
      %v1768 = vrot.slane %v1766, 5
      %v1769 = vor.u32 %v1765, %v1768
      %v1770 = vrot.slane %v1769, 4
      %v1772 = vshll.u32 %v1697, 16
      %v1774 = vrot.slane %v1772, 5
      %v1775 = vsel %vm228, %v1770, %v1774
      %v1776 = vshrl.u32 %v1697, 16
      %v1778 = vrot.slane %v1776, 4
      %v1779 = vor.u32 %v1778, %v1774
      %v1780 = vrot.slane %v1779, 4
      %v1782 = vshll.u32 %v1698, 16
      %v1784 = vrot.slane %v1782, 5
      %v1785 = vsel %vm228, %v1780, %v1784
      %v1787 = vshrl.u32 %v1699, 16
      %v1789 = vrot.slane %v1787, 4
      %v1790 = vshll.u32 %v1699, 16
      %v1792 = vrot.slane %v1790, 5
      %v1793 = vor.u32 %v1789, %v1792
      %v1794 = vrot.slane %v1793, 4
      %v1796 = vshll.u32 %v1700, 16
      %v1798 = vrot.slane %v1796, 5
      %v1799 = vsel %vm228, %v1794, %v1798
      %v1800 = vshrl.u32 %v1700, 16
      %v1802 = vrot.slane %v1800, 4
      %v1803 = vor.u32 %v1802, %v1798
      %v1804 = vrot.slane %v1803, 4
      %v1806 = vshll.u32 %v1701, 16
      %v1808 = vrot.slane %v1806, 5
      %v1809 = vsel %vm228, %v1804, %v1808
      %v1811 = vshrl.u32 %v1702, 16
      %v1813 = vrot.slane %v1811, 4
      %v1814 = vshll.u32 %v1702, 16
      %v1816 = vrot.slane %v1814, 5
      %v1817 = vor.u32 %v1813, %v1816
      %v1818 = vrot.slane %v1817, 4
      %v1820 = vshll.u32 %v1703, 16
      %v1822 = vrot.slane %v1820, 5
      %v1823 = vsel %vm228, %v1818, %v1822
      %v1824 = vshrl.u32 %v1703, 16
      %v1826 = vrot.slane %v1824, 4
      %v1827 = vor.u32 %v1826, %v1822
      %v1828 = vrot.slane %v1827, 4
      %v1830 = vshll.u32 %v1704, 16
      %v1832 = vrot.slane %v1830, 5
      %v1833 = vsel %vm228, %v1828, %v1832
      %v1835 = vshrl.u32 %v1705, 16
      %v1837 = vrot.slane %v1835, 4
      %v1838 = vshll.u32 %v1705, 16
      %v1840 = vrot.slane %v1838, 5
      %v1841 = vor.u32 %v1837, %v1840
      %v1842 = vrot.slane %v1841, 4
      %v1844 = vshll.u32 %v1706, 16
      %v1846 = vrot.slane %v1844, 5
      %v1847 = vsel %vm228, %v1842, %v1846
      %v1848 = vshrl.u32 %v1706, 16
      %v1850 = vrot.slane %v1848, 4
      %v1851 = vor.u32 %v1850, %v1846
      %v1852 = vrot.slane %v1851, 4
      %v1854 = vshll.u32 %v1707, 16
      %v1856 = vrot.slane %v1854, 5
      %v1857 = vsel %vm228, %v1852, %v1856
      %v1859 = vshrl.u32 %v1708, 16
      %v1861 = vrot.slane %v1859, 4
      %v1862 = vshll.u32 %v1708, 16
      %v1864 = vrot.slane %v1862, 5
      %v1865 = vor.u32 %v1861, %v1864
      %v1866 = vrot.slane %v1865, 4
      %v1868 = vshll.u32 %v1709, 16
      %v1870 = vrot.slane %v1868, 5
      %v1871 = vsel %vm228, %v1866, %v1870
      %v1872 = vshrl.u32 %v1709, 16
      %v1874 = vrot.slane %v1872, 4
      %v1875 = vor.u32 %v1874, %v1870
      %v1876 = vrot.slane %v1875, 4
      %v1878 = vshll.u32 %v1710, 16
      %v1880 = vrot.slane %v1878, 5
      %v1881 = vsel %vm228, %v1876, %v1880
      %v1883 = vshrl.u32 %v1711, 16
      %v1885 = vrot.slane %v1883, 4
      %v1886 = vshll.u32 %v1711, 16
      %v1888 = vrot.slane %v1886, 5
      %v1889 = vor.u32 %v1885, %v1888
      %v1890 = vrot.slane %v1889, 4
      %v1892 = vshll.u32 %v1712, 16
      %v1894 = vrot.slane %v1892, 5
      %v1895 = vsel %vm228, %v1890, %v1894
      %v1896 = vshrl.u32 %v1712, 16
      %v1898 = vrot.slane %v1896, 4
      %v1899 = vor.u32 %v1898, %v1894
      %v1900 = vrot.slane %v1899, 4
      %v1902 = vshll.u32 %v1713, 16
      %v1904 = vrot.slane %v1902, 5
      %v1905 = vsel %vm228, %v1900, %v1904
      %s1906 = scalar_lea.vmem %s1, 14
      %v1907 = vld [vmem:[%s1906] sm:$0x3]
      %v1908 = vunpack.c.l.b16 %v1727
      %v1909 = vunpack.c.l.b16 %v1737
      %v1910 = vunpack.c.l.b16 %v1751
      %v1911 = vunpack.c.l.b16 %v1761
      %v1912 = vunpack.c.l.b16 %v1775
      %v1913 = vunpack.c.l.b16 %v1785
      %v1914 = vunpack.c.l.b16 %v1799
      %v1915 = vunpack.c.l.b16 %v1809
      %v1916 = vunpack.c.l.b16 %v1823
      %v1917 = vunpack.c.l.b16 %v1833
      %v1918 = vunpack.c.l.b16 %v1847
      %v1919 = vunpack.c.l.b16 %v1857
      %v1920 = vunpack.c.l.b16 %v1871
      %v1921 = vunpack.c.l.b16 %v1881
      %v1922 = vunpack.c.l.b16 %v1895
      %v1923 = vunpack.c.l.b16 %v1905
      %v1924 = vpack.c.b16 %v1909, %v1908
      %v1925 = vpack.c.b16 %v1911, %v1910
      %v1926 = vpack.c.b16 %v1913, %v1912
      %v1927 = vpack.c.b16 %v1915, %v1914
      %v1928 = vpack.c.b16 %v1917, %v1916
      %v1929 = vpack.c.b16 %v1919, %v1918
      %v1930 = vpack.c.b16 %v1921, %v1920
      %v1931 = vpack.c.b16 %v1923, %v1922
      %v1933 = vsel %vm447, %v1924, 0
      %v1936 = vsel %vm447, %v1925, 0
      %v1939 = vsel %vm447, %v1926, 0
      %v1942 = vsel %vm447, %v1927, 0
      %v1945 = vsel %vm447, %v1928, 0
      %v1948 = vsel %vm447, %v1929, 0
      %v1951 = vsel %vm447, %v1930, 0
      %v1954 = vsel %vm447, %v1931, 0
      %v1957 = vsel %vm472, %v1907, 0
      %1959 = vmatpush.bf16.msra.mxu0 0
      %1960 = vmatpush.bf16.msra.mxu0 0
      %1961 = vmatpush.bf16.msra.mxu0 0
      %1962 = vmatpush.bf16.msra.mxu0 0
      %1963 = vmatpush.bf16.msra.mxu0 0
      %1964 = vmatpush.bf16.msra.mxu0 0
      %1965 = vmatpush.bf16.msra.mxu0 0
      %1966 = vmatpush.bf16.msra.mxu0 %v1957
      %1967 = vmatmul.bf16.gmra.mxu0 %v1933
      %v1968 = vpop.f32.mrf.mxu0
      %v1969 = vadd.f32 0.0, %v1968
      %v1970 = vpop.f32.mrf.mxu0
      %v1971 = vadd.f32 0.0, %v1970
      %1972 = vmatmul.bf16.gmra.mxu0 %v1936
      %v1973 = vpop.f32.mrf.mxu0
      %v1974 = vadd.f32 0.0, %v1973
      %v1975 = vpop.f32.mrf.mxu0
      %v1976 = vadd.f32 0.0, %v1975
      %1977 = vmatmul.bf16.gmra.mxu0 %v1939
      %v1978 = vpop.f32.mrf.mxu0
      %v1979 = vadd.f32 0.0, %v1978
      %v1980 = vpop.f32.mrf.mxu0
      %v1981 = vadd.f32 0.0, %v1980
      %1982 = vmatmul.bf16.gmra.mxu0 %v1942
      %v1983 = vpop.f32.mrf.mxu0
      %v1984 = vadd.f32 0.0, %v1983
      %v1985 = vpop.f32.mrf.mxu0
      %v1986 = vadd.f32 0.0, %v1985
      %1987 = vmatmul.bf16.gmra.mxu0 %v1945
      %v1988 = vpop.f32.mrf.mxu0
      %v1989 = vadd.f32 0.0, %v1988
      %v1990 = vpop.f32.mrf.mxu0
      %v1991 = vadd.f32 0.0, %v1990
      %1992 = vmatmul.bf16.gmra.mxu0 %v1948
      %v1993 = vpop.f32.mrf.mxu0
      %v1994 = vadd.f32 0.0, %v1993
      %v1995 = vpop.f32.mrf.mxu0
      %v1996 = vadd.f32 0.0, %v1995
      %1997 = vmatmul.bf16.gmra.mxu0 %v1951
      %v1998 = vpop.f32.mrf.mxu0
      %v1999 = vadd.f32 0.0, %v1998
      %v2000 = vpop.f32.mrf.mxu0
      %v2001 = vadd.f32 0.0, %v2000
      %2002 = vmatmul.bf16.gmra.mxu0 %v1954
      %v2003 = vpop.f32.mrf.mxu0
      %v2004 = vadd.f32 0.0, %v2003
      %v2005 = vpop.f32.mrf.mxu0
      %v2006 = vadd.f32 0.0, %v2005
      %2007 = vdwg.mxu0
      %v2008 = vadd.f32 %v1674, %v1969
      %v2009 = vadd.f32 %v1675, %v1971
      %v2010 = vadd.f32 %v1676, %v1974
      %v2011 = vadd.f32 %v1677, %v1976
      %v2012 = vadd.f32 %v1678, %v1979
      %v2013 = vadd.f32 %v1679, %v1981
      %v2014 = vadd.f32 %v1680, %v1984
      %v2015 = vadd.f32 %v1681, %v1986
      %v2016 = vadd.f32 %v1682, %v1989
      %v2017 = vadd.f32 %v1683, %v1991
      %v2018 = vadd.f32 %v1684, %v1994
      %v2019 = vadd.f32 %v1685, %v1996
      %v2020 = vadd.f32 %v1686, %v1999
      %v2021 = vadd.f32 %v1687, %v2001
      %v2022 = vadd.f32 %v1688, %v2004
      %v2023 = vadd.f32 %v1689, %v2006
      %v2024 = vld [vmem:[%s1539] sm:$0xe]
      %v2025 = vld [vmem:[%s1539 + $0xc] sm:$0xe]
      %v2026 = vld [vmem:[%s1539 + $0x18] sm:$0xe]
      %v2027 = vld [vmem:[%s1539 + $0x24] sm:$0xe]
      %v2028 = vld [vmem:[%s1539 + $0x30] sm:$0xe]
      %v2029 = vld [vmem:[%s1539 + $0x3c] sm:$0xe]
      %v2030 = vld [vmem:[%s1539 + $0x48] sm:$0xe]
      %v2031 = vld [vmem:[%s1539 + $0x54] sm:$0xe]
      %v2056 = vrot.slane %v2024, 5
      %v2057 = vrot.slane %v2056, 4
      %v2058 = vrot.slane %v1691, 5
      %v2059 = vsel %vm667, %v2057, %v2058
      %v2060 = vrot.slane %v2058, 4
      %v2061 = vrot.slane %v1692, 5
      %v2062 = vsel %vm667, %v2060, %v2061
      %v2063 = vrot.slane %v2025, 5
      %v2064 = vrot.slane %v2063, 4
      %v2065 = vrot.slane %v1694, 5
      %v2066 = vsel %vm667, %v2064, %v2065
      %v2067 = vrot.slane %v2065, 4
      %v2068 = vrot.slane %v1695, 5
      %v2069 = vsel %vm667, %v2067, %v2068
      %v2070 = vrot.slane %v2026, 5
      %v2071 = vrot.slane %v2070, 4
      %v2072 = vrot.slane %v1697, 5
      %v2073 = vsel %vm667, %v2071, %v2072
      %v2074 = vrot.slane %v2072, 4
      %v2075 = vrot.slane %v1698, 5
      %v2076 = vsel %vm667, %v2074, %v2075
      %v2077 = vrot.slane %v2027, 5
      %v2078 = vrot.slane %v2077, 4
      %v2079 = vrot.slane %v1700, 5
      %v2080 = vsel %vm667, %v2078, %v2079
      %v2081 = vrot.slane %v2079, 4
      %v2082 = vrot.slane %v1701, 5
      %v2083 = vsel %vm667, %v2081, %v2082
      %v2084 = vrot.slane %v2028, 5
      %v2085 = vrot.slane %v2084, 4
      %v2086 = vrot.slane %v1703, 5
      %v2087 = vsel %vm667, %v2085, %v2086
      %v2088 = vrot.slane %v2086, 4
      %v2089 = vrot.slane %v1704, 5
      %v2090 = vsel %vm667, %v2088, %v2089
      %v2091 = vrot.slane %v2029, 5
      %v2092 = vrot.slane %v2091, 4
      %v2093 = vrot.slane %v1706, 5
      %v2094 = vsel %vm667, %v2092, %v2093
      %v2095 = vrot.slane %v2093, 4
      %v2096 = vrot.slane %v1707, 5
      %v2097 = vsel %vm667, %v2095, %v2096
      %v2098 = vrot.slane %v2030, 5
      %v2099 = vrot.slane %v2098, 4
      %v2100 = vrot.slane %v1709, 5
      %v2101 = vsel %vm667, %v2099, %v2100
      %v2102 = vrot.slane %v2100, 4
      %v2103 = vrot.slane %v1710, 5
      %v2104 = vsel %vm667, %v2102, %v2103
      %v2105 = vrot.slane %v2031, 5
      %v2106 = vrot.slane %v2105, 4
      %v2107 = vrot.slane %v1712, 5
      %v2108 = vsel %vm667, %v2106, %v2107
      %v2109 = vrot.slane %v2107, 4
      %v2110 = vrot.slane %v1713, 5
      %v2111 = vsel %vm667, %v2109, %v2110
      %s2112 = scalar_lea.vmem %s1, 16
      %v2113 = vld [vmem:[%s2112] sm:$0x3]
      %v2114 = vunpack.c.l.b16 %v2059
      %v2115 = vunpack.c.l.b16 %v2062
      %v2116 = vunpack.c.l.b16 %v2066
      %v2117 = vunpack.c.l.b16 %v2069
      %v2118 = vunpack.c.l.b16 %v2073
      %v2119 = vunpack.c.l.b16 %v2076
      %v2120 = vunpack.c.l.b16 %v2080
      %v2121 = vunpack.c.l.b16 %v2083
      %v2122 = vunpack.c.l.b16 %v2087
      %v2123 = vunpack.c.l.b16 %v2090
      %v2124 = vunpack.c.l.b16 %v2094
      %v2125 = vunpack.c.l.b16 %v2097
      %v2126 = vunpack.c.l.b16 %v2101
      %v2127 = vunpack.c.l.b16 %v2104
      %v2128 = vunpack.c.l.b16 %v2108
      %v2129 = vunpack.c.l.b16 %v2111
      %v2130 = vpack.c.b16 %v2115, %v2114
      %v2131 = vpack.c.b16 %v2117, %v2116
      %v2132 = vpack.c.b16 %v2119, %v2118
      %v2133 = vpack.c.b16 %v2121, %v2120
      %v2134 = vpack.c.b16 %v2123, %v2122
      %v2135 = vpack.c.b16 %v2125, %v2124
      %v2136 = vpack.c.b16 %v2127, %v2126
      %v2137 = vpack.c.b16 %v2129, %v2128
      %v2139 = vsel %vm447, %v2130, 0
      %v2142 = vsel %vm447, %v2131, 0
      %v2145 = vsel %vm447, %v2132, 0
      %v2148 = vsel %vm447, %v2133, 0
      %v2151 = vsel %vm447, %v2134, 0
      %v2154 = vsel %vm447, %v2135, 0
      %v2157 = vsel %vm447, %v2136, 0
      %v2160 = vsel %vm447, %v2137, 0
      %v2163 = vsel %vm472, %v2113, 0
      %2165 = vmatpush.bf16.msra.mxu0 0
      %2166 = vmatpush.bf16.msra.mxu0 0
      %2167 = vmatpush.bf16.msra.mxu0 0
      %2168 = vmatpush.bf16.msra.mxu0 0
      %2169 = vmatpush.bf16.msra.mxu0 0
      %2170 = vmatpush.bf16.msra.mxu0 0
      %2171 = vmatpush.bf16.msra.mxu0 0
      %2172 = vmatpush.bf16.msra.mxu0 %v2163
      %2173 = vmatmul.bf16.gmra.mxu0 %v2139
      %v2174 = vpop.f32.mrf.mxu0
      %v2175 = vadd.f32 0.0, %v2174
      %v2176 = vpop.f32.mrf.mxu0
      %v2177 = vadd.f32 0.0, %v2176
      %2178 = vmatmul.bf16.gmra.mxu0 %v2142
      %v2179 = vpop.f32.mrf.mxu0
      %v2180 = vadd.f32 0.0, %v2179
      %v2181 = vpop.f32.mrf.mxu0
      %v2182 = vadd.f32 0.0, %v2181
      %2183 = vmatmul.bf16.gmra.mxu0 %v2145
      %v2184 = vpop.f32.mrf.mxu0
      %v2185 = vadd.f32 0.0, %v2184
      %v2186 = vpop.f32.mrf.mxu0
      %v2187 = vadd.f32 0.0, %v2186
      %2188 = vmatmul.bf16.gmra.mxu0 %v2148
      %v2189 = vpop.f32.mrf.mxu0
      %v2190 = vadd.f32 0.0, %v2189
      %v2191 = vpop.f32.mrf.mxu0
      %v2192 = vadd.f32 0.0, %v2191
      %2193 = vmatmul.bf16.gmra.mxu0 %v2151
      %v2194 = vpop.f32.mrf.mxu0
      %v2195 = vadd.f32 0.0, %v2194
      %v2196 = vpop.f32.mrf.mxu0
      %v2197 = vadd.f32 0.0, %v2196
      %2198 = vmatmul.bf16.gmra.mxu0 %v2154
      %v2199 = vpop.f32.mrf.mxu0
      %v2200 = vadd.f32 0.0, %v2199
      %v2201 = vpop.f32.mrf.mxu0
      %v2202 = vadd.f32 0.0, %v2201
      %2203 = vmatmul.bf16.gmra.mxu0 %v2157
      %v2204 = vpop.f32.mrf.mxu0
      %v2205 = vadd.f32 0.0, %v2204
      %v2206 = vpop.f32.mrf.mxu0
      %v2207 = vadd.f32 0.0, %v2206
      %2208 = vmatmul.bf16.gmra.mxu0 %v2160
      %v2209 = vpop.f32.mrf.mxu0
      %v2210 = vadd.f32 0.0, %v2209
      %v2211 = vpop.f32.mrf.mxu0
      %v2212 = vadd.f32 0.0, %v2211
      %2213 = vdwg.mxu0
      %v2214 = vadd.f32 %v2008, %v2175
      %v2215 = vadd.f32 %v2009, %v2177
      %v2216 = vadd.f32 %v2010, %v2180
      %v2217 = vadd.f32 %v2011, %v2182
      %v2218 = vadd.f32 %v2012, %v2185
      %v2219 = vadd.f32 %v2013, %v2187
      %v2220 = vadd.f32 %v2014, %v2190
      %v2221 = vadd.f32 %v2015, %v2192
      %v2222 = vadd.f32 %v2016, %v2195
      %v2223 = vadd.f32 %v2017, %v2197
      %v2224 = vadd.f32 %v2018, %v2200
      %v2225 = vadd.f32 %v2019, %v2202
      %v2226 = vadd.f32 %v2020, %v2205
      %v2227 = vadd.f32 %v2021, %v2207
      %v2228 = vadd.f32 %v2022, %v2210
      %v2229 = vadd.f32 %v2023, %v2212
      %v2230 = vld [vmem:[%s2] sm:$0x1]
      %v2232 = vperm.slane %v2230, 0
      %v2234 = vadd.f32 %v2214, %v2232
      %v2235 = vadd.f32 %v2215, %v2232
      %v2236 = vadd.f32 %v2216, %v2232
      %v2237 = vadd.f32 %v2217, %v2232
      %v2238 = vadd.f32 %v2218, %v2232
      %v2239 = vadd.f32 %v2219, %v2232
      %v2240 = vadd.f32 %v2220, %v2232
      %v2241 = vadd.f32 %v2221, %v2232
      %v2242 = vadd.f32 %v2222, %v2232
      %v2243 = vadd.f32 %v2223, %v2232
      %v2244 = vadd.f32 %v2224, %v2232
      %v2245 = vadd.f32 %v2225, %v2232
      %v2246 = vadd.f32 %v2226, %v2232
      %v2247 = vadd.f32 %v2227, %v2232
      %v2248 = vadd.f32 %v2228, %v2232
      %v2249 = vadd.f32 %v2229, %v2232
      %2250 = vst [vmem:[%s194] sm:$0xff] %v2234
      %2251 = vst [vmem:[%s194 + $0x8] sm:$0xff] %v2235
      %2252 = vst [vmem:[%s194 + $0x10] sm:$0xff] %v2236
      %2253 = vst [vmem:[%s194 + $0x18] sm:$0xff] %v2237
      %2254 = vst [vmem:[%s194 + $0x20] sm:$0xff] %v2238
      %2255 = vst [vmem:[%s194 + $0x28] sm:$0xff] %v2239
      %2256 = vst [vmem:[%s194 + $0x30] sm:$0xff] %v2240
      %2257 = vst [vmem:[%s194 + $0x38] sm:$0xff] %v2241
      %2258 = vst [vmem:[%s194 + $0x40] sm:$0xff] %v2242
      %2259 = vst [vmem:[%s194 + $0x48] sm:$0xff] %v2243
      %2260 = vst [vmem:[%s194 + $0x50] sm:$0xff] %v2244
      %2261 = vst [vmem:[%s194 + $0x58] sm:$0xff] %v2245
      %2262 = vst [vmem:[%s194 + $0x60] sm:$0xff] %v2246
      %2263 = vst [vmem:[%s194 + $0x68] sm:$0xff] %v2247
      %2264 = vst [vmem:[%s194 + $0x70] sm:$0xff] %v2248
      %2265 = vst [vmem:[%s194 + $0x78] sm:$0xff] %v2249
      %s2266 = smul.u32 8, %s19
      %p2267 = scmp.lt.s32.totalorder %s18, 1
      %s2268 = scalar_select %p2267, %s18, 1
      %p2269 = scmp.lt.s32.totalorder %s2266, 15
      %s2270 = scalar_select %p2269, %s2266, 15
      %s2271 = smul.addr %s2270, 2
      %s2272 = smul.addr %s2268, 32
      %s2273 = sadd.s32 %s2271, %s2272
      %s2274 = smul.addr %s2273, 8
      %s2275 = scalar_lea.vmem %s3, %s2274
      // Predicated region
      $region33: #{conv_layer_apply.1} parent=31 // pred_check
        %p2276 = pneg %p114
      $region34: #{conv_layer_apply.1} parent=31 // pred_check_branch
        %2278 = sbr.rel (%p2276) target = $region36
      $region35: #{conv_layer_apply.1} parent=31 // pred_region
        %s2279 = smul.u32 8, %s19
      $region36: #{conv_layer_apply.1} parent=31 // pred_fallthru
        _
    $region32: #{conv_layer_apply.1} parent=5 // pred_fallthru
      _
    %p2280 = scmp.le.s32.totalorder 2, %s9
    // Predicated region
    $region37: #{conv_layer_apply.1} parent=5 // pred_check
      %p2281 = pneg %p2280
    $region38: #{conv_layer_apply.1} parent=5 // pred_check_branch
      %2283 = sbr.rel (%p2281) target = $region40
    $region39: #{conv_layer_apply.1} parent=5 // pred_region
      %s2284 = ssub.s32 %s9, 2
      // Predicated region
      $region41: #{conv_layer_apply.1} parent=39 // pred_check
        %p2285 = pneg %p120
      $region42: #{conv_layer_apply.1} parent=39 // pred_check_branch
        %2287 = sbr.rel (%p2285) target = $region44
      $region43: #{conv_layer_apply.1} parent=39 // pred_region
        %s2288 = smul.u32 8, %s21
        %p2289 = scmp.lt.s32.totalorder %s20, 1
        %s2290 = scalar_select %p2289, %s20, 1
        %p2291 = scmp.lt.s32.totalorder %s2288, 15
        %s2292 = scalar_select %p2291, %s2288, 15
        %s2293 = smul.addr %s2292, 2
        %s2294 = smul.addr %s2290, 32
        %s2295 = sadd.s32 %s2293, %s2294
        %s2296 = smul.addr %s2295, 8
        %s2297 = scalar_lea.vmem %s3, %s2296
      $region44: #{conv_layer_apply.1} parent=39 // pred_fallthru
        _
    $region40: #{conv_layer_apply.1} parent=5 // pred_fallthru
      _
  $region6: #{conv_layer_apply.1} parent=0 // loop_footer
    %s13 = sadd.s32 1, %s9
  $region7: #{conv_layer_apply.1} parent=0 // loop_footer_branch
    %8 = sbr.rel target = $region3
  $region8: #{conv_layer_apply.1} parent=0 // loop_exit
    _

</llo_original>
